<compile_context>
chip_gen: v6e
topology: v6e:2x2x1
jax: 0.10.0
libtpu: 0.0.40
codegen_flags: <defaults>
</compile_context>

<pallas_src>
import functools

import jax
import jax.numpy as jnp
from jax import lax
from jax.experimental import pallas as pl
from jax.experimental.pallas import tpu as pltpu


def _eye(n, dtype=jnp.float32):
    r = lax.broadcasted_iota(jnp.int32, (n, n), 0)
    c = lax.broadcasted_iota(jnp.int32, (n, n), 1)
    return jnp.where(r == c, 1.0, 0.0).astype(dtype)


def _dm_kernel(ax_ref, axbx_ref, c_ref, x0_ref, f_ref, o_ref,
               x_ref, dx_ref, ft_ref, xs_ref, *, dt, m_total, t_total):
    """One (MM rows) x (TT time-steps) block of the integration.

    ax_ref, axbx_ref, c_ref, x0_ref : (1, MM)   f32  (loop invariants)
    f_ref, o_ref                    : (MM, TT)  f32  (rows = B*N, lanes = time)
    x_ref, dx_ref                   : (1, MM)   f32  scratch (state carry)
    ft_ref, xs_ref                  : (TT, MM)  f32  scratch (time-major slabs)
    """
    mm, tt = f_ref.shape
    m_idx = pl.program_id(0)
    t_idx = pl.program_id(1)

    # ---- reset the integrator state at the start of each row-tile's sweep --
    @pl.when(t_idx == 0)
    def _():
        x_ref[...] = x0_ref[...]
        dx_ref[...] = jnp.zeros_like(dx_ref)

    # ---- relayout force block (MM, TT) -> (TT, MM) via identity matmul -----
    # Zero lanes beyond the valid time range so padded/garbage lanes of edge
    # blocks cannot propagate through the contraction (0 * NaN = NaN).
    t_valid = t_total - t_idx * tt
    col_t = lax.broadcasted_iota(jnp.int32, (mm, tt), 1)
    f_blk = jnp.where(col_t < t_valid, f_ref[...], 0.0)
    eye_t = _eye(tt)
    ft_ref[...] = lax.dot_general(
        eye_t, f_blk, (((1,), (1,)), ((), ())),
        preferred_element_type=jnp.float32,
        precision=lax.Precision.HIGHEST)                       # exact relayout

    # ---- hoisted, pre-broadcast loop invariants ----------------------------
    ax = ax_ref[...]        # (1, MM)
    axbx = axbx_ref[...]    # (1, MM)  == ax * bx
    c = c_ref[...]          # (1, MM)  == ax * bx * goal

    # ---- sequential time integration over this block -----------------------
    def body(i, carry):
        x, dx = carry
        f_i = ft_ref[pl.ds(i, 1), :]                           # (1, MM)
        ddx = c - axbx * x - ax * dx + f_i
        dx = dx + ddx * dt
        x = x + dx * dt
        xs_ref[pl.ds(i, 1), :] = x
        return x, dx

    x, dx = lax.fori_loop(0, tt, body, (x_ref[...], dx_ref[...]), unroll=8)
    x_ref[...] = x
    dx_ref[...] = dx

    # ---- relayout results (TT, MM) -> (MM, TT) and emit the output block ---
    m_valid = m_total - m_idx * mm
    col_m = lax.broadcasted_iota(jnp.int32, (tt, mm), 1)
    xs = jnp.where(col_m < m_valid, xs_ref[...], 0.0)
    eye_m = _eye(mm)
    o_ref[...] = lax.dot_general(
        eye_m, xs, (((1,), (1,)), ((), ())),
        preferred_element_type=jnp.float32,
        precision=lax.Precision.HIGHEST).astype(o_ref.dtype)


def dm_forward(force, ax, bx, dt, goal=None, x0=None, *,
               block_m=256, block_t=128):
    """force: (batch, ndof, time) float32.  Returns trajectory of same shape."""
    f32 = jnp.float32
    force = jnp.asarray(force, f32)
    batch, ndof, time = force.shape
    m_total = batch * ndof

    ax1 = jnp.broadcast_to(jnp.asarray(ax, f32), (ndof,))
    bx1 = jnp.broadcast_to(jnp.asarray(bx, f32), (ndof,))
    goal_bn = (jnp.zeros((batch, ndof), f32) if goal is None
               else jnp.broadcast_to(jnp.asarray(goal, f32), (batch, ndof)))
    x0_bn = (jnp.zeros((batch, ndof), f32) if x0 is None
             else jnp.broadcast_to(jnp.asarray(x0, f32), (batch, ndof)))

    # Loop-invariant coefficients, hoisted out of the kernel entirely and
    # pre-broadcast to the flattened (1, B*N) lane-dense layout.
    ax_bn = jnp.broadcast_to(ax1, (batch, ndof))
    axbx_bn = jnp.broadcast_to(ax1 * bx1, (batch, ndof))
    ax_m = ax_bn.reshape(1, m_total)
    axbx_m = axbx_bn.reshape(1, m_total)
    c_m = (axbx_bn * goal_bn).reshape(1, m_total)
    x0_m = x0_bn.reshape(1, m_total)

    # (B, N, T) -> (B*N, T): free, row-major reshape (no HBM transpose).
    force_mt = force.reshape(m_total, time)

    mm = m_total if m_total <= block_m else block_m   # block_m: multiple of 8
    tt = time if time <= block_t else block_t         # block_t: multiple of 128
    grid = (pl.cdiv(m_total, mm), pl.cdiv(time, tt))

    kernel = functools.partial(_dm_kernel, dt=float(dt),
                               m_total=m_total, t_total=time)

    vec_spec = pl.BlockSpec((1, mm), lambda m, t: (0, m))
    blk_spec = pl.BlockSpec((mm, tt), lambda m, t: (m, t))

    traj_mt = pl.pallas_call(
        kernel,
        out_shape=jax.ShapeDtypeStruct((m_total, time), f32),
        grid=grid,
        in_specs=[vec_spec, vec_spec, vec_spec, vec_spec, blk_spec],
        out_specs=blk_spec,
        scratch_shapes=[
            pltpu.VMEM((1, mm), f32),    # x  state (carried across time blocks)
            pltpu.VMEM((1, mm), f32),    # dx state
            pltpu.VMEM((tt, mm), f32),   # time-major force slab
            pltpu.VMEM((tt, mm), f32),   # time-major trajectory slab
        ],
        compiler_params=pltpu.CompilerParams(
            dimension_semantics=("parallel", "arbitrary"),
            vmem_limit_bytes=32 * 1024 * 1024,
        ),
        cost_estimate=pl.CostEstimate(
            flops=10 * m_total * time,
            transcendentals=0,
            bytes_accessed=2 * m_total * time * 4,
        ),
    )(ax_m, axbx_m, c_m, x0_m, force_mt)

    return traj_mt.reshape(batch, ndof, time)   # free reshape back


def dm_reference(force_bnt, ax, bx, dt, goal=None, x0=None):
    """Pure-JAX reference matching the PyTorch forward exactly."""
    batch, ndof, time = force_bnt.shape
    f32 = jnp.float32
    ax = jnp.broadcast_to(jnp.asarray(ax, f32), (ndof,))
    bx = jnp.broadcast_to(jnp.asarray(bx, f32), (ndof,))
    goal = jnp.zeros((ndof,), f32) if goal is None else jnp.asarray(goal, f32)
    x = jnp.zeros((ndof,), f32) if x0 is None else jnp.asarray(x0, f32)
    x = jnp.broadcast_to(x, (batch, ndof))
    dx = jnp.zeros((batch, ndof), f32)
    cols = []
    for i in range(time):
        ddx = ax * (bx * (goal - x) - dx) + force_bnt[:, :, i]
        dx = dx + ddx * dt
        x = x + dx * dt
        cols.append(x)
    return jnp.stack(cols, axis=-1)


if __name__ == "__main__":
    key = jax.random.PRNGKey(0)

    # ---- case 1: small shapes consistent with the module --------------------
    batch, ndof, time = 2, 4, 8
    dt = 0.01
    ax = jnp.linspace(1.0, 2.0, ndof, dtype=jnp.float32)
    bx = jnp.linspace(0.5, 1.5, ndof, dtype=jnp.float32)

    kf, kg, kf2, kg2, kx2 = jax.random.split(key, 5)
    force = jax.random.normal(kf, (batch, ndof, time), dtype=jnp.float32)
    goal = jax.random.normal(kg, (ndof,), dtype=jnp.float32)

    traj = jax.block_until_ready(dm_forward(force, ax, bx, dt, goal=goal))
    ref = dm_reference(force, ax, bx, dt, goal=goal)
    assert traj.shape == force.shape
    assert jnp.allclose(traj, ref, atol=1e-5, rtol=1e-5), "case1 mismatch"

    # ---- case 2: exercises the streamed grid (2 time blocks, partial edge) --
    b2, n2, t2 = 3, 5, 200
    ax2 = jnp.linspace(1.0, 2.0, n2, dtype=jnp.float32)
    bx2 = jnp.linspace(0.5, 1.5, n2, dtype=jnp.float32)
    force2 = 0.1 * jax.random.normal(kf2, (b2, n2, t2), dtype=jnp.float32)
    goal2 = jax.random.normal(kg2, (b2, n2), dtype=jnp.float32)
    x02 = 0.5 * jax.random.normal(kx2, (n2,), dtype=jnp.float32)

    traj2 = jax.block_until_ready(
        dm_forward(force2, ax2, bx2, dt, goal=goal2, x0=x02))
    ref2 = dm_reference(force2, ax2, bx2, dt, goal=goal2, x0=x02)
    assert traj2.shape == force2.shape
    assert jnp.allclose(traj2, ref2, atol=1e-4, rtol=1e-4), "case2 mismatch"

    print("KERNEL_OK")
</pallas_src>

<mosaic_0001>
module attributes {stable_mosaic.version = 11 : i64} {
  func.func @_dm_kernel(%arg0: i32, %arg1: i32, %arg2: memref<1x8xf32, #tpu.memory_space<vmem>>, %arg3: memref<1x8xf32, #tpu.memory_space<vmem>>, %arg4: memref<1x8xf32, #tpu.memory_space<vmem>>, %arg5: memref<1x8xf32, #tpu.memory_space<vmem>>, %arg6: memref<8x8xf32, #tpu.memory_space<vmem>>, %arg7: memref<8x8xf32, #tpu.memory_space<vmem>>, %arg8: memref<1x8xf32, #tpu.memory_space<vmem>>, %arg9: memref<1x8xf32, #tpu.memory_space<vmem>>, %arg10: memref<8x8xf32, #tpu.memory_space<vmem>>, %arg11: memref<8x8xf32, #tpu.memory_space<vmem>>) attributes {dimension_semantics = [#tpu.dimension_semantics<parallel>, #tpu.dimension_semantics<arbitrary>], iteration_bounds = array<i64: 1, 1>, scalar_prefetch = 0 : i64, scratch_operands = 4 : i64, tpu.core_type = #tpu.core_type<tc>, window_params = [{transform_indices = @transform_0, window_bounds = array<i64: 1, 8>}, {transform_indices = @transform_1, window_bounds = array<i64: 1, 8>}, {transform_indices = @transform_2, window_bounds = array<i64: 1, 8>}, {transform_indices = @transform_3, window_bounds = array<i64: 1, 8>}, {transform_indices = @transform_4, window_bounds = array<i64: 8, 8>}, {transform_indices = @transform_5, window_bounds = array<i64: 8, 8>}]} {
    %c0_i32 = arith.constant 0 : i32
    %0 = arith.cmpi eq, %arg1, %c0_i32 : i32
    %1 = arith.extui %0 : i1 to i32
    %c0_i32_0 = arith.constant 0 : i32
    %2 = arith.cmpi ne, %1, %c0_i32_0 : i32
    scf.if %2 {
      %c0_66 = arith.constant 0 : index
      %c0_67 = arith.constant 0 : index
      %162 = vector.load %arg5[%c0_66, %c0_67] : memref<1x8xf32, #tpu.memory_space<vmem>>, vector<1x8xf32>
      %c0_68 = arith.constant 0 : index
      %c0_69 = arith.constant 0 : index
      %163 = vector.load %arg8[%c0_68, %c0_69] : memref<1x8xf32, #tpu.memory_space<vmem>>, vector<1x8xf32>
      tpu.vector_store %arg8[%c0_68, %c0_69], %162 {strides = array<i32>} : memref<1x8xf32, #tpu.memory_space<vmem>>, vector<1x8xf32>,
      %cst_70 = arith.constant 0.000000e+00 : f32
      %164 = vector.broadcast %cst_70 : f32 to vector<1x8xf32>
      %c0_71 = arith.constant 0 : index
      %c0_72 = arith.constant 0 : index
      %165 = vector.load %arg9[%c0_71, %c0_72] : memref<1x8xf32, #tpu.memory_space<vmem>>, vector<1x8xf32>
      tpu.vector_store %arg9[%c0_71, %c0_72], %164 {strides = array<i32>} : memref<1x8xf32, #tpu.memory_space<vmem>>, vector<1x8xf32>,
    } else {
    }
    %c8_i32 = arith.constant 8 : i32
    %3 = arith.muli %arg1, %c8_i32 : i32
    %c8_i32_1 = arith.constant 8 : i32
    %4 = arith.subi %c8_i32_1, %3 : i32
    %5 = tpu.iota {dimensions = array<i32: 1>} : vector<8x8xi32>
    %6 = vector.broadcast %4 : i32 to vector<8x8xi32>
    %7 = arith.cmpi slt, %5, %6 : vector<8x8xi32>
    %c0 = arith.constant 0 : index
    %c0_2 = arith.constant 0 : index
    %8 = vector.load %arg6[%c0, %c0_2] : memref<8x8xf32, #tpu.memory_space<vmem>>, vector<8x8xf32>
    %cst = arith.constant 0.000000e+00 : f32
    %9 = vector.broadcast %cst : f32 to vector<8x8xf32>
    %10 = arith.select %7, %8, %9 : vector<8x8xi1>, vector<8x8xf32>
    %11 = tpu.iota {dimensions = array<i32: 0>} : vector<8x8xi32>
    %12 = tpu.iota {dimensions = array<i32: 1>} : vector<8x8xi32>
    %13 = arith.cmpi eq, %11, %12 : vector<8x8xi32>
    %cst_3 = arith.constant 1.000000e+00 : f32
    %cst_4 = arith.constant 0.000000e+00 : f32
    %14 = vector.broadcast %cst_3 : f32 to vector<8x8xf32>
    %15 = vector.broadcast %cst_4 : f32 to vector<8x8xf32>
    %16 = arith.select %13, %14, %15 : vector<8x8xi1>, vector<8x8xf32>
    %cst_5 = arith.constant dense<0.000000e+00> : vector<8x8xf32>
    %17 = tpu.matmul %16, %10, %cst_5 {dimension_numbers = #tpu.dot_dimension_numbers<[1], [1], [0], [0], [0, 0, 1, 0], [], []>, precision = #tpu.contract_precision<fp32>} : vector<8x8xf32>, vector<8x8xf32>, vector<8x8xf32> -> vector<8x8xf32>
    %c0_6 = arith.constant 0 : index
    %c0_7 = arith.constant 0 : index
    %18 = vector.load %arg10[%c0_6, %c0_7] : memref<8x8xf32, #tpu.memory_space<vmem>>, vector<8x8xf32>
    tpu.vector_store %arg10[%c0_6, %c0_7], %17 {strides = array<i32>} : memref<8x8xf32, #tpu.memory_space<vmem>>, vector<8x8xf32>,
    %c0_8 = arith.constant 0 : index
    %c0_9 = arith.constant 0 : index
    %19 = vector.load %arg2[%c0_8, %c0_9] : memref<1x8xf32, #tpu.memory_space<vmem>>, vector<1x8xf32>
    %c0_10 = arith.constant 0 : index
    %c0_11 = arith.constant 0 : index
    %20 = vector.load %arg3[%c0_10, %c0_11] : memref<1x8xf32, #tpu.memory_space<vmem>>, vector<1x8xf32>
    %c0_12 = arith.constant 0 : index
    %c0_13 = arith.constant 0 : index
    %21 = vector.load %arg4[%c0_12, %c0_13] : memref<1x8xf32, #tpu.memory_space<vmem>>, vector<1x8xf32>
    %c0_14 = arith.constant 0 : index
    %c0_15 = arith.constant 0 : index
    %22 = vector.load %arg8[%c0_14, %c0_15] : memref<1x8xf32, #tpu.memory_space<vmem>>, vector<1x8xf32>
    %c0_16 = arith.constant 0 : index
    %c0_17 = arith.constant 0 : index
    %23 = vector.load %arg9[%c0_16, %c0_17] : memref<1x8xf32, #tpu.memory_space<vmem>>, vector<1x8xf32>
    %c0_i32_18 = arith.constant 0 : i32
    %24 = arith.index_cast %c0_i32_18 : i32 to index
    %c0_19 = arith.constant 0 : index
    %25 = vector.load %arg10[%24, %c0_19] : memref<8x8xf32, #tpu.memory_space<vmem>>, vector<1x8xf32>
    %26 = arith.mulf %20, %22 : vector<1x8xf32>
    %27 = arith.subf %21, %26 : vector<1x8xf32>
    %28 = arith.mulf %19, %23 : vector<1x8xf32>
    %29 = arith.subf %27, %28 : vector<1x8xf32>
    %30 = arith.addf %29, %25 : vector<1x8xf32>
    %cst_20 = arith.constant 0.00999999977 : f32
    %31 = vector.broadcast %cst_20 : f32 to vector<1x8xf32>
    %32 = arith.mulf %30, %31 : vector<1x8xf32>
    %33 = arith.addf %23, %32 : vector<1x8xf32>
    %cst_21 = arith.constant 0.00999999977 : f32
    %34 = vector.broadcast %cst_21 : f32 to vector<1x8xf32>
    %35 = arith.mulf %33, %34 : vector<1x8xf32>
    %36 = arith.addf %22, %35 : vector<1x8xf32>
    %37 = arith.index_cast %c0_i32_18 : i32 to index
    %c0_22 = arith.constant 0 : index
    %38 = vector.load %arg11[%37, %c0_22] : memref<8x8xf32, #tpu.memory_space<vmem>>, vector<1x8xf32>
    tpu.vector_store %arg11[%37, %c0_22], %36 {strides = array<i32>} : memref<8x8xf32, #tpu.memory_space<vmem>>, vector<1x8xf32>,
    %c1_i32 = arith.constant 1 : i32
    %39 = arith.index_cast %c1_i32 : i32 to index
    %c0_23 = arith.constant 0 : index
    %40 = vector.load %arg10[%39, %c0_23] : memref<8x8xf32, #tpu.memory_space<vmem>>, vector<1x8xf32>
    %41 = arith.mulf %20, %36 : vector<1x8xf32>
    %42 = arith.subf %21, %41 : vector<1x8xf32>
    %43 = arith.mulf %19, %33 : vector<1x8xf32>
    %44 = arith.subf %42, %43 : vector<1x8xf32>
    %45 = arith.addf %44, %40 : vector<1x8xf32>
    %cst_24 = arith.constant 0.00999999977 : f32
    %46 = vector.broadcast %cst_24 : f32 to vector<1x8xf32>
    %47 = arith.mulf %45, %46 : vector<1x8xf32>
    %48 = arith.addf %33, %47 : vector<1x8xf32>
    %cst_25 = arith.constant 0.00999999977 : f32
    %49 = vector.broadcast %cst_25 : f32 to vector<1x8xf32>
    %50 = arith.mulf %48, %49 : vector<1x8xf32>
    %51 = arith.addf %36, %50 : vector<1x8xf32>
    %52 = arith.index_cast %c1_i32 : i32 to index
    %c0_26 = arith.constant 0 : index
    %53 = vector.load %arg11[%52, %c0_26] : memref<8x8xf32, #tpu.memory_space<vmem>>, vector<1x8xf32>
    tpu.vector_store %arg11[%52, %c0_26], %51 {strides = array<i32>} : memref<8x8xf32, #tpu.memory_space<vmem>>, vector<1x8xf32>,
    %c2_i32 = arith.constant 2 : i32
    %54 = arith.index_cast %c2_i32 : i32 to index
    %c0_27 = arith.constant 0 : index
    %55 = vector.load %arg10[%54, %c0_27] : memref<8x8xf32, #tpu.memory_space<vmem>>, vector<1x8xf32>
    %56 = arith.mulf %20, %51 : vector<1x8xf32>
    %57 = arith.subf %21, %56 : vector<1x8xf32>
    %58 = arith.mulf %19, %48 : vector<1x8xf32>
    %59 = arith.subf %57, %58 : vector<1x8xf32>
    %60 = arith.addf %59, %55 : vector<1x8xf32>
    %cst_28 = arith.constant 0.00999999977 : f32
    %61 = vector.broadcast %cst_28 : f32 to vector<1x8xf32>
    %62 = arith.mulf %60, %61 : vector<1x8xf32>
    %63 = arith.addf %48, %62 : vector<1x8xf32>
    %cst_29 = arith.constant 0.00999999977 : f32
    %64 = vector.broadcast %cst_29 : f32 to vector<1x8xf32>
    %65 = arith.mulf %63, %64 : vector<1x8xf32>
    %66 = arith.addf %51, %65 : vector<1x8xf32>
    %67 = arith.index_cast %c2_i32 : i32 to index
    %c0_30 = arith.constant 0 : index
    %68 = vector.load %arg11[%67, %c0_30] : memref<8x8xf32, #tpu.memory_space<vmem>>, vector<1x8xf32>
    tpu.vector_store %arg11[%67, %c0_30], %66 {strides = array<i32>} : memref<8x8xf32, #tpu.memory_space<vmem>>, vector<1x8xf32>,
    %c3_i32 = arith.constant 3 : i32
    %69 = arith.index_cast %c3_i32 : i32 to index
    %c0_31 = arith.constant 0 : index
    %70 = vector.load %arg10[%69, %c0_31] : memref<8x8xf32, #tpu.memory_space<vmem>>, vector<1x8xf32>
    %71 = arith.mulf %20, %66 : vector<1x8xf32>
    %72 = arith.subf %21, %71 : vector<1x8xf32>
    %73 = arith.mulf %19, %63 : vector<1x8xf32>
    %74 = arith.subf %72, %73 : vector<1x8xf32>
    %75 = arith.addf %74, %70 : vector<1x8xf32>
    %cst_32 = arith.constant 0.00999999977 : f32
    %76 = vector.broadcast %cst_32 : f32 to vector<1x8xf32>
    %77 = arith.mulf %75, %76 : vector<1x8xf32>
    %78 = arith.addf %63, %77 : vector<1x8xf32>
    %cst_33 = arith.constant 0.00999999977 : f32
    %79 = vector.broadcast %cst_33 : f32 to vector<1x8xf32>
    %80 = arith.mulf %78, %79 : vector<1x8xf32>
    %81 = arith.addf %66, %80 : vector<1x8xf32>
    %82 = arith.index_cast %c3_i32 : i32 to index
    %c0_34 = arith.constant 0 : index
    %83 = vector.load %arg11[%82, %c0_34] : memref<8x8xf32, #tpu.memory_space<vmem>>, vector<1x8xf32>
    tpu.vector_store %arg11[%82, %c0_34], %81 {strides = array<i32>} : memref<8x8xf32, #tpu.memory_space<vmem>>, vector<1x8xf32>,
    %c4_i32 = arith.constant 4 : i32
    %84 = arith.index_cast %c4_i32 : i32 to index
    %c0_35 = arith.constant 0 : index
    %85 = vector.load %arg10[%84, %c0_35] : memref<8x8xf32, #tpu.memory_space<vmem>>, vector<1x8xf32>
    %86 = arith.mulf %20, %81 : vector<1x8xf32>
    %87 = arith.subf %21, %86 : vector<1x8xf32>
    %88 = arith.mulf %19, %78 : vector<1x8xf32>
    %89 = arith.subf %87, %88 : vector<1x8xf32>
    %90 = arith.addf %89, %85 : vector<1x8xf32>
    %cst_36 = arith.constant 0.00999999977 : f32
    %91 = vector.broadcast %cst_36 : f32 to vector<1x8xf32>
    %92 = arith.mulf %90, %91 : vector<1x8xf32>
    %93 = arith.addf %78, %92 : vector<1x8xf32>
    %cst_37 = arith.constant 0.00999999977 : f32
    %94 = vector.broadcast %cst_37 : f32 to vector<1x8xf32>
    %95 = arith.mulf %93, %94 : vector<1x8xf32>
    %96 = arith.addf %81, %95 : vector<1x8xf32>
    %97 = arith.index_cast %c4_i32 : i32 to index
    %c0_38 = arith.constant 0 : index
    %98 = vector.load %arg11[%97, %c0_38] : memref<8x8xf32, #tpu.memory_space<vmem>>, vector<1x8xf32>
    tpu.vector_store %arg11[%97, %c0_38], %96 {strides = array<i32>} : memref<8x8xf32, #tpu.memory_space<vmem>>, vector<1x8xf32>,
    %c5_i32 = arith.constant 5 : i32
    %99 = arith.index_cast %c5_i32 : i32 to index
    %c0_39 = arith.constant 0 : index
    %100 = vector.load %arg10[%99, %c0_39] : memref<8x8xf32, #tpu.memory_space<vmem>>, vector<1x8xf32>
    %101 = arith.mulf %20, %96 : vector<1x8xf32>
    %102 = arith.subf %21, %101 : vector<1x8xf32>
    %103 = arith.mulf %19, %93 : vector<1x8xf32>
    %104 = arith.subf %102, %103 : vector<1x8xf32>
    %105 = arith.addf %104, %100 : vector<1x8xf32>
    %cst_40 = arith.constant 0.00999999977 : f32
    %106 = vector.broadcast %cst_40 : f32 to vector<1x8xf32>
    %107 = arith.mulf %105, %106 : vector<1x8xf32>
    %108 = arith.addf %93, %107 : vector<1x8xf32>
    %cst_41 = arith.constant 0.00999999977 : f32
    %109 = vector.broadcast %cst_41 : f32 to vector<1x8xf32>
    %110 = arith.mulf %108, %109 : vector<1x8xf32>
    %111 = arith.addf %96, %110 : vector<1x8xf32>
    %112 = arith.index_cast %c5_i32 : i32 to index
    %c0_42 = arith.constant 0 : index
    %113 = vector.load %arg11[%112, %c0_42] : memref<8x8xf32, #tpu.memory_space<vmem>>, vector<1x8xf32>
    tpu.vector_store %arg11[%112, %c0_42], %111 {strides = array<i32>} : memref<8x8xf32, #tpu.memory_space<vmem>>, vector<1x8xf32>,
    %c6_i32 = arith.constant 6 : i32
    %114 = arith.index_cast %c6_i32 : i32 to index
    %c0_43 = arith.constant 0 : index
    %115 = vector.load %arg10[%114, %c0_43] : memref<8x8xf32, #tpu.memory_space<vmem>>, vector<1x8xf32>
    %116 = arith.mulf %20, %111 : vector<1x8xf32>
    %117 = arith.subf %21, %116 : vector<1x8xf32>
    %118 = arith.mulf %19, %108 : vector<1x8xf32>
    %119 = arith.subf %117, %118 : vector<1x8xf32>
    %120 = arith.addf %119, %115 : vector<1x8xf32>
    %cst_44 = arith.constant 0.00999999977 : f32
    %121 = vector.broadcast %cst_44 : f32 to vector<1x8xf32>
    %122 = arith.mulf %120, %121 : vector<1x8xf32>
    %123 = arith.addf %108, %122 : vector<1x8xf32>
    %cst_45 = arith.constant 0.00999999977 : f32
    %124 = vector.broadcast %cst_45 : f32 to vector<1x8xf32>
    %125 = arith.mulf %123, %124 : vector<1x8xf32>
    %126 = arith.addf %111, %125 : vector<1x8xf32>
    %127 = arith.index_cast %c6_i32 : i32 to index
    %c0_46 = arith.constant 0 : index
    %128 = vector.load %arg11[%127, %c0_46] : memref<8x8xf32, #tpu.memory_space<vmem>>, vector<1x8xf32>
    tpu.vector_store %arg11[%127, %c0_46], %126 {strides = array<i32>} : memref<8x8xf32, #tpu.memory_space<vmem>>, vector<1x8xf32>,
    %c7_i32 = arith.constant 7 : i32
    %129 = arith.index_cast %c7_i32 : i32 to index
    %c0_47 = arith.constant 0 : index
    %130 = vector.load %arg10[%129, %c0_47] : memref<8x8xf32, #tpu.memory_space<vmem>>, vector<1x8xf32>
    %131 = arith.mulf %20, %126 : vector<1x8xf32>
    %132 = arith.subf %21, %131 : vector<1x8xf32>
    %133 = arith.mulf %19, %123 : vector<1x8xf32>
    %134 = arith.subf %132, %133 : vector<1x8xf32>
    %135 = arith.addf %134, %130 : vector<1x8xf32>
    %cst_48 = arith.constant 0.00999999977 : f32
    %136 = vector.broadcast %cst_48 : f32 to vector<1x8xf32>
    %137 = arith.mulf %135, %136 : vector<1x8xf32>
    %138 = arith.addf %123, %137 : vector<1x8xf32>
    %cst_49 = arith.constant 0.00999999977 : f32
    %139 = vector.broadcast %cst_49 : f32 to vector<1x8xf32>
    %140 = arith.mulf %138, %139 : vector<1x8xf32>
    %141 = arith.addf %126, %140 : vector<1x8xf32>
    %142 = arith.index_cast %c7_i32 : i32 to index
    %c0_50 = arith.constant 0 : index
    %143 = vector.load %arg11[%142, %c0_50] : memref<8x8xf32, #tpu.memory_space<vmem>>, vector<1x8xf32>
    tpu.vector_store %arg11[%142, %c0_50], %141 {strides = array<i32>} : memref<8x8xf32, #tpu.memory_space<vmem>>, vector<1x8xf32>,
    %c8_i32_51 = arith.constant 8 : i32
    %c0_52 = arith.constant 0 : index
    %c0_53 = arith.constant 0 : index
    %144 = vector.load %arg8[%c0_52, %c0_53] : memref<1x8xf32, #tpu.memory_space<vmem>>, vector<1x8xf32>
    tpu.vector_store %arg8[%c0_52, %c0_53], %141 {strides = array<i32>} : memref<1x8xf32, #tpu.memory_space<vmem>>, vector<1x8xf32>,
    %c0_54 = arith.constant 0 : index
    %c0_55 = arith.constant 0 : index
    %145 = vector.load %arg9[%c0_54, %c0_55] : memref<1x8xf32, #tpu.memory_space<vmem>>, vector<1x8xf32>
    tpu.vector_store %arg9[%c0_54, %c0_55], %138 {strides = array<i32>} : memref<1x8xf32, #tpu.memory_space<vmem>>, vector<1x8xf32>,
    %c8_i32_56 = arith.constant 8 : i32
    %146 = arith.muli %arg0, %c8_i32_56 : i32
    %c8_i32_57 = arith.constant 8 : i32
    %147 = arith.subi %c8_i32_57, %146 : i32
    %148 = tpu.iota {dimensions = array<i32: 1>} : vector<8x8xi32>
    %149 = vector.broadcast %147 : i32 to vector<8x8xi32>
    %150 = arith.cmpi slt, %148, %149 : vector<8x8xi32>
    %c0_58 = arith.constant 0 : index
    %c0_59 = arith.constant 0 : index
    %151 = vector.load %arg11[%c0_58, %c0_59] : memref<8x8xf32, #tpu.memory_space<vmem>>, vector<8x8xf32>
    %cst_60 = arith.constant 0.000000e+00 : f32
    %152 = vector.broadcast %cst_60 : f32 to vector<8x8xf32>
    %153 = arith.select %150, %151, %152 : vector<8x8xi1>, vector<8x8xf32>
    %154 = tpu.iota {dimensions = array<i32: 0>} : vector<8x8xi32>
    %155 = tpu.iota {dimensions = array<i32: 1>} : vector<8x8xi32>
    %156 = arith.cmpi eq, %154, %155 : vector<8x8xi32>
    %cst_61 = arith.constant 1.000000e+00 : f32
    %cst_62 = arith.constant 0.000000e+00 : f32
    %157 = vector.broadcast %cst_61 : f32 to vector<8x8xf32>
    %158 = vector.broadcast %cst_62 : f32 to vector<8x8xf32>
    %159 = arith.select %156, %157, %158 : vector<8x8xi1>, vector<8x8xf32>
    %cst_63 = arith.constant dense<0.000000e+00> : vector<8x8xf32>
    %160 = tpu.matmul %159, %153, %cst_63 {dimension_numbers = #tpu.dot_dimension_numbers<[1], [1], [0], [0], [0, 0, 1, 0], [], []>, precision = #tpu.contract_precision<fp32>} : vector<8x8xf32>, vector<8x8xf32>, vector<8x8xf32> -> vector<8x8xf32>
    %c0_64 = arith.constant 0 : index
    %c0_65 = arith.constant 0 : index
    %161 = vector.load %arg7[%c0_64, %c0_65] : memref<8x8xf32, #tpu.memory_space<vmem>>, vector<8x8xf32>
    tpu.vector_store %arg7[%c0_64, %c0_65], %160 {strides = array<i32>} : memref<8x8xf32, #tpu.memory_space<vmem>>, vector<8x8xf32>,
    return
  }
  func.func @transform_0(%arg0: i32, %arg1: i32) -> (i32, i32) {
    %c0_i32 = arith.constant 0 : i32
    %c0_i32_0 = arith.constant 0 : i32
    return %c0_i32, %arg0 : i32, i32
  }
  func.func @transform_1(%arg0: i32, %arg1: i32) -> (i32, i32) {
    %c0_i32 = arith.constant 0 : i32
    %c0_i32_0 = arith.constant 0 : i32
    return %c0_i32, %arg0 : i32, i32
  }
  func.func @transform_2(%arg0: i32, %arg1: i32) -> (i32, i32) {
    %c0_i32 = arith.constant 0 : i32
    %c0_i32_0 = arith.constant 0 : i32
    return %c0_i32, %arg0 : i32, i32
  }
  func.func @transform_3(%arg0: i32, %arg1: i32) -> (i32, i32) {
    %c0_i32 = arith.constant 0 : i32
    %c0_i32_0 = arith.constant 0 : i32
    return %c0_i32, %arg0 : i32, i32
  }
  func.func @transform_4(%arg0: i32, %arg1: i32) -> (i32, i32) {
    %c0_i32 = arith.constant 0 : i32
    return %arg0, %arg1 : i32, i32
  }
  func.func @transform_5(%arg0: i32, %arg1: i32) -> (i32, i32) {
    %c0_i32 = arith.constant 0 : i32
    return %arg0, %arg1 : i32, i32
  }
}

</mosaic_0001>

<llo_original>
// kernel: tpu_custom_call.1
$region0: #{tpu_custom_call.1}
  #allocation0 [shape = 'u32[]', space=smem, size = 0x4, offset = 0x4, fixed_abs, tag = 'smem constant byte address 0x4 - core index']
  #allocation1 [shape = 'u32[144,128]{1,0:T(1,128)}', space=vmem, size = 0x12000, scoped, tag = 'internal scratch']
  #allocation2 [shape = 'f32[1,8]{1,0:T(1,128)}', space=vmem, size = 0x200, scoped, tag = 'scratch operand']
  #allocation3 [shape = 'f32[1,8]{1,0:T(1,128)}', space=vmem, size = 0x200, scoped, tag = 'scratch operand']
  #allocation4 [shape = 'f32[8,8]{1,0:T(8,128)}', space=vmem, size = 0x1000, scoped, tag = 'scratch operand']
  #allocation5 [shape = 'f32[8,8]{1,0:T(8,128)}', space=vmem, size = 0x1000, scoped, tag = 'scratch operand']
  %s0 = inlined_call_operand.hbm [shape: f32[1,8], index: 0, kind: input, shape index: {}]
  %s1 = inlined_call_operand.vmem [shape: f32[1,8], index: 1, kind: input, shape index: {}]
  %s2 = inlined_call_operand.vmem [shape: f32[1,8], index: 2, kind: input, shape index: {}]
  %s3 = inlined_call_operand.vmem [shape: f32[1,8], index: 3, kind: input, shape index: {}]
  %s4 = inlined_call_operand.hbm [shape: f32[8,8], index: 4, kind: input, shape index: {}]
  %s5 = inlined_call_operand.hbm [shape: f32[8,8], index: 5, kind: output, shape index: {}]
  %s6 = sld [smem:[#allocation0]]
  $region42: #{tpu_custom_call.1} parent=0
    _
  %s8 = ssub.s32 1, %s6
  %s9 = scalar_select 0, %s8, %s6
  $region1: #{tpu_custom_call.1} parent=0
    #allocation6 [shape = 'u8[512]{0}', space=vmem, size = 0x400, scoped, tag = 'input window, operand 0, single buffered']
    #allocation7 [shape = 's32[1]{0}', space=sflag, size = 0x4, scoped, tag = 'scoped memory for tpu_custom_call.1']
    #allocation8 [shape = 's32[1]{0}', space=sflag, size = 0x4, scoped, tag = 'scoped memory for tpu_custom_call.1']
    #allocation9 [shape = 'u8[4096]{0}', space=vmem, size = 0x1000, scoped, tag = 'input window, operand 4, single buffered']
    #allocation10 [shape = 's32[1]{0}', space=sflag, size = 0x4, scoped, tag = 'scoped memory for tpu_custom_call.1']
    #allocation11 [shape = 'u8[4096]{0}', space=vmem, size = 0x1000, scoped, tag = 'output window, operand 0, single buffered']
    %10 = vsyncpa [#allocation7], 0
    %11 = vsyncpa [#allocation10], 0
    %12 = vsyncpa [#allocation8], 0
    // Predicated region
    $region2: #{tpu_custom_call.1} parent=1 // pred_check
      _
    $region3: #{tpu_custom_call.1} parent=1 // pred_check_branch
      %14 = sbr.rel (0) target = $region5
    $region4: #{tpu_custom_call.1} parent=1 // pred_region
      %s16 = ssub.s32 16, 16
      %17 = vsyncadd [#allocation7], %s16
      %s19 = sshll.u32 [#allocation6], 4
      %s20 = int_to_ptr.vmem [resolvable:$true] %s19
      %22 = dma.hbm_to_vmem [thread:$0]  %s0, 16, %s20, [#allocation7]
    $region5: #{tpu_custom_call.1} parent=1 // pred_fallthru
      _
    // Predicated region
    $region6: #{tpu_custom_call.1} parent=1 // pred_check
      _
    $region7: #{tpu_custom_call.1} parent=1 // pred_check_branch
      %24 = sbr.rel (0) target = $region9
    $region8: #{tpu_custom_call.1} parent=1 // pred_region
      _
    $region9: #{tpu_custom_call.1} parent=1 // pred_fallthru
      _
    // Predicated region
    $region10: #{tpu_custom_call.1} parent=1 // pred_check
      _
    $region11: #{tpu_custom_call.1} parent=1 // pred_check_branch
      %26 = sbr.rel (0) target = $region13
    $region12: #{tpu_custom_call.1} parent=1 // pred_region
      _
    $region13: #{tpu_custom_call.1} parent=1 // pred_fallthru
      _
    // Predicated region
    $region14: #{tpu_custom_call.1} parent=1 // pred_check
      _
    $region15: #{tpu_custom_call.1} parent=1 // pred_check_branch
      %28 = sbr.rel (0) target = $region17
    $region16: #{tpu_custom_call.1} parent=1 // pred_region
      _
    $region17: #{tpu_custom_call.1} parent=1 // pred_fallthru
      _
    // Predicated region
    $region18: #{tpu_custom_call.1} parent=1 // pred_check
      _
    $region19: #{tpu_custom_call.1} parent=1 // pred_check_branch
      %30 = sbr.rel (0) target = $region21
    $region20: #{tpu_custom_call.1} parent=1 // pred_region
      %s32 = ssub.s32 128, 128
      %33 = vsyncadd [#allocation10], %s32
      %s35 = sshll.u32 [#allocation9], 4
      %s36 = int_to_ptr.vmem [resolvable:$true] %s35
      %38 = dma.hbm_to_vmem [thread:$0]  %s4, 128, %s36, [#allocation10]
    $region21: #{tpu_custom_call.1} parent=1 // pred_fallthru
      _
    // Predicated region
    $region22: #{tpu_custom_call.1} parent=1 // pred_check
      _
    $region23: #{tpu_custom_call.1} parent=1 // pred_check_branch
      %40 = sbr.rel (0) target = $region25
    $region24: #{tpu_custom_call.1} parent=1 // pred_region
      %41 = dma.done [#allocation7], 16
    $region25: #{tpu_custom_call.1} parent=1 // pred_fallthru
      _
    // Predicated region
    $region26: #{tpu_custom_call.1} parent=1 // pred_check
      _
    $region27: #{tpu_custom_call.1} parent=1 // pred_check_branch
      %43 = sbr.rel (0) target = $region29
    $region28: #{tpu_custom_call.1} parent=1 // pred_region
      %44 = dma.done [#allocation10], 128
    $region29: #{tpu_custom_call.1} parent=1 // pred_fallthru
      _
    %p45 = scmp.eq.s32.totalorder 0, 0
    // Predicated region
    $region30: #{tpu_custom_call.1} parent=1 // pred_check
      %p46 = pneg %p45
    $region31: #{tpu_custom_call.1} parent=1 // pred_check_branch
      %48 = sbr.rel (%p46) target = $region33
    $region32: #{tpu_custom_call.1} parent=1 // pred_region
      %v49 = vld [vmem:[%s3] sm:$0x1]
      %vm50 = vcmask 57344
      %51 = vst.msk [vmem:[#allocation2] sm:$0x1] %vm50, %v49
      %52 = vst.msk [vmem:[#allocation3] sm:$0x1] %vm50, 0.0
    $region33: #{tpu_custom_call.1} parent=1 // pred_fallthru
      _
    %s53 = smul.u32 0, 8
    %s54 = ssub.s32 8, %s53
    %v55 = vlaneseq
    %v56 = vand.u32 %v55, 127
    %v57 = vstv %s54
    %vm58 = vcmp.lt.s32.totalorder %v56, %v57
    %v59 = vld [vmem:[#allocation9] sm:$0xff]
    %v60 = vsel %vm58, %v59, 0.0
    %v61 = vlaneseq
    %v62 = vshrl.u32 %v61, 7
    %vm63 = vcmp.eq.s32.totalorder %v62, %v56
    %v64 = vsel %vm63, 1.0, 0.0
    %vm65 = vcmask 64512
    %v67 = vsel %vm65, %v64, 0
    %v70 = vsel %vm65, %v60, 0
    %72 = vmatprep.subr.mxu0 0.0
    %73 = vmatpush1.xpose.msra.mxu0 0.0
    %74 = vmatprep.subr.mxu0 0.0
    %75 = vmatpush1.xpose.msra.mxu0 0.0
    %76 = vmatprep.subr.mxu0 0.0
    %77 = vmatpush1.xpose.msra.mxu0 0.0
    %78 = vmatprep.subr.mxu0 0.0
    %79 = vmatpush1.xpose.msra.mxu0 0.0
    %80 = vmatprep.subr.mxu0 0.0
    %81 = vmatpush1.xpose.msra.mxu0 0.0
    %82 = vmatprep.subr.mxu0 0.0
    %83 = vmatpush1.xpose.msra.mxu0 0.0
    %84 = vmatprep.subr.mxu0 0.0
    %85 = vmatpush1.xpose.msra.mxu0 0.0
    %86 = vmatprep.subr.mxu0 0.0
    %87 = vmatpush1.xpose.msra.mxu0 0.0
    %88 = vmatprep.subr.mxu0 0.0
    %89 = vmatpush1.xpose.msra.mxu0 0.0
    %90 = vmatprep.subr.mxu0 0.0
    %91 = vmatpush1.xpose.msra.mxu0 0.0
    %92 = vmatprep.subr.mxu0 0.0
    %93 = vmatpush1.xpose.msra.mxu0 0.0
    %94 = vmatprep.subr.mxu0 0.0
    %95 = vmatpush1.xpose.msra.mxu0 0.0
    %96 = vmatprep.subr.mxu0 0.0
    %97 = vmatpush1.xpose.msra.mxu0 0.0
    %98 = vmatprep.subr.mxu0 0.0
    %99 = vmatpush1.xpose.msra.mxu0 0.0
    %100 = vmatprep.subr.mxu0 0.0
    %101 = vmatpush1.xpose.msra.mxu0 0.0
    %102 = vmatprep.subr.mxu0 0.0
    %v103 = vand.u32 %v70, 4294901760
    %104 = vmatpush1.xpose.msra.mxu0 %v103
    %105 = vmatprep.subr.mxu0 0.0
    %106 = vmatpush2.xpose.msra.mxu0 0.0
    %107 = vmatprep.subr.mxu0 0.0
    %108 = vmatpush2.xpose.msra.mxu0 0.0
    %109 = vmatprep.subr.mxu0 0.0
    %110 = vmatpush2.xpose.msra.mxu0 0.0
    %111 = vmatprep.subr.mxu0 0.0
    %112 = vmatpush2.xpose.msra.mxu0 0.0
    %113 = vmatprep.subr.mxu0 0.0
    %114 = vmatpush2.xpose.msra.mxu0 0.0
    %115 = vmatprep.subr.mxu0 0.0
    %116 = vmatpush2.xpose.msra.mxu0 0.0
    %117 = vmatprep.subr.mxu0 0.0
    %118 = vmatpush2.xpose.msra.mxu0 0.0
    %119 = vmatprep.subr.mxu0 0.0
    %120 = vmatpush2.xpose.msra.mxu0 0.0
    %121 = vmatprep.subr.mxu0 0.0
    %122 = vmatpush2.xpose.msra.mxu0 0.0
    %123 = vmatprep.subr.mxu0 0.0
    %124 = vmatpush2.xpose.msra.mxu0 0.0
    %125 = vmatprep.subr.mxu0 0.0
    %126 = vmatpush2.xpose.msra.mxu0 0.0
    %127 = vmatprep.subr.mxu0 0.0
    %128 = vmatpush2.xpose.msra.mxu0 0.0
    %129 = vmatprep.subr.mxu0 0.0
    %130 = vmatpush2.xpose.msra.mxu0 0.0
    %131 = vmatprep.subr.mxu0 0.0
    %132 = vmatpush2.xpose.msra.mxu0 0.0
    %133 = vmatprep.subr.mxu0 0.0
    %134 = vmatpush2.xpose.msra.mxu0 0.0
    %135 = vmatprep.subr.mxu0 0.0
    %136 = vmatpush2.xpose.msra.mxu0 0.0
    %137 = vmatprep.mubr.f32.mxu0 0.0
    %v138 = vand.u32 %v67, 4294901760
    %v139 = vsub.f32 %v67, %v138
    %v140 = vand.u32 %v139, 4294901760
    %v141 = vsub.f32 %v139, %v140
    %v142 = vand.u32 %v141, 4294901760
    %143 = vmatmul.mubr.f32.gmra.mxu0 %v142
    %v144 = vpop.f32.mrf.mxu0
    %v145 = vadd.f32 0.0, %v144
    %v146 = vpop.f32.mrf.mxu0
    %147 = vdwg.mxu0
    %148 = vmatprep.subr.mxu0 0.0
    %149 = vmatpush1.xpose.msra.mxu0 0.0
    %150 = vmatprep.subr.mxu0 0.0
    %151 = vmatpush1.xpose.msra.mxu0 0.0
    %152 = vmatprep.subr.mxu0 0.0
    %153 = vmatpush1.xpose.msra.mxu0 0.0
    %154 = vmatprep.subr.mxu0 0.0
    %155 = vmatpush1.xpose.msra.mxu0 0.0
    %156 = vmatprep.subr.mxu0 0.0
    %157 = vmatpush1.xpose.msra.mxu0 0.0
    %158 = vmatprep.subr.mxu0 0.0
    %159 = vmatpush1.xpose.msra.mxu0 0.0
    %160 = vmatprep.subr.mxu0 0.0
    %161 = vmatpush1.xpose.msra.mxu0 0.0
    %162 = vmatprep.subr.mxu0 0.0
    %163 = vmatpush1.xpose.msra.mxu0 0.0
    %164 = vmatprep.subr.mxu0 0.0
    %165 = vmatpush1.xpose.msra.mxu0 0.0
    %166 = vmatprep.subr.mxu0 0.0
    %167 = vmatpush1.xpose.msra.mxu0 0.0
    %168 = vmatprep.subr.mxu0 0.0
    %169 = vmatpush1.xpose.msra.mxu0 0.0
    %170 = vmatprep.subr.mxu0 0.0
    %171 = vmatpush1.xpose.msra.mxu0 0.0
    %172 = vmatprep.subr.mxu0 0.0
    %173 = vmatpush1.xpose.msra.mxu0 0.0
    %174 = vmatprep.subr.mxu0 0.0
    %175 = vmatpush1.xpose.msra.mxu0 0.0
    %176 = vmatprep.subr.mxu0 0.0
    %177 = vmatpush1.xpose.msra.mxu0 0.0
    %178 = vmatprep.subr.mxu0 0.0
    %v179 = vand.u32 %v70, 4294901760
    %v180 = vsub.f32 %v70, %v179
    %v181 = vand.u32 %v180, 4294901760
    %v182 = vsub.f32 %v180, %v181
    %v183 = vand.u32 %v182, 4294901760
    %184 = vmatpush1.xpose.msra.mxu0 %v183
    %185 = vmatprep.subr.mxu0 0.0
    %186 = vmatpush2.xpose.msra.mxu0 0.0
    %187 = vmatprep.subr.mxu0 0.0
    %188 = vmatpush2.xpose.msra.mxu0 0.0
    %189 = vmatprep.subr.mxu0 0.0
    %190 = vmatpush2.xpose.msra.mxu0 0.0
    %191 = vmatprep.subr.mxu0 0.0
    %192 = vmatpush2.xpose.msra.mxu0 0.0
    %193 = vmatprep.subr.mxu0 0.0
    %194 = vmatpush2.xpose.msra.mxu0 0.0
    %195 = vmatprep.subr.mxu0 0.0
    %196 = vmatpush2.xpose.msra.mxu0 0.0
    %197 = vmatprep.subr.mxu0 0.0
    %198 = vmatpush2.xpose.msra.mxu0 0.0
    %199 = vmatprep.subr.mxu0 0.0
    %200 = vmatpush2.xpose.msra.mxu0 0.0
    %201 = vmatprep.subr.mxu0 0.0
    %202 = vmatpush2.xpose.msra.mxu0 0.0
    %203 = vmatprep.subr.mxu0 0.0
    %204 = vmatpush2.xpose.msra.mxu0 0.0
    %205 = vmatprep.subr.mxu0 0.0
    %206 = vmatpush2.xpose.msra.mxu0 0.0
    %207 = vmatprep.subr.mxu0 0.0
    %208 = vmatpush2.xpose.msra.mxu0 0.0
    %209 = vmatprep.subr.mxu0 0.0
    %210 = vmatpush2.xpose.msra.mxu0 0.0
    %211 = vmatprep.subr.mxu0 0.0
    %212 = vmatpush2.xpose.msra.mxu0 0.0
    %213 = vmatprep.subr.mxu0 0.0
    %214 = vmatpush2.xpose.msra.mxu0 0.0
    %215 = vmatprep.subr.mxu0 0.0
    %216 = vmatpush2.xpose.msra.mxu0 0.0
    %217 = vmatprep.mubr.f32.mxu0 0.0
    %v218 = vand.u32 %v67, 4294901760
    %219 = vmatmul.mubr.f32.gmra.mxu0 %v218
    %v220 = vpop.f32.mrf.mxu0
    %v221 = vadd.f32 %v145, %v220
    %v222 = vpop.f32.mrf.mxu0
    %223 = vdwg.mxu0
    %224 = vmatprep.subr.mxu0 0.0
    %225 = vmatpush1.xpose.msra.mxu0 0.0
    %226 = vmatprep.subr.mxu0 0.0
    %227 = vmatpush1.xpose.msra.mxu0 0.0
    %228 = vmatprep.subr.mxu0 0.0
    %229 = vmatpush1.xpose.msra.mxu0 0.0
    %230 = vmatprep.subr.mxu0 0.0
    %231 = vmatpush1.xpose.msra.mxu0 0.0
    %232 = vmatprep.subr.mxu0 0.0
    %233 = vmatpush1.xpose.msra.mxu0 0.0
    %234 = vmatprep.subr.mxu0 0.0
    %235 = vmatpush1.xpose.msra.mxu0 0.0
    %236 = vmatprep.subr.mxu0 0.0
    %237 = vmatpush1.xpose.msra.mxu0 0.0
    %238 = vmatprep.subr.mxu0 0.0
    %239 = vmatpush1.xpose.msra.mxu0 0.0
    %240 = vmatprep.subr.mxu0 0.0
    %241 = vmatpush1.xpose.msra.mxu0 0.0
    %242 = vmatprep.subr.mxu0 0.0
    %243 = vmatpush1.xpose.msra.mxu0 0.0
    %244 = vmatprep.subr.mxu0 0.0
    %245 = vmatpush1.xpose.msra.mxu0 0.0
    %246 = vmatprep.subr.mxu0 0.0
    %247 = vmatpush1.xpose.msra.mxu0 0.0
    %248 = vmatprep.subr.mxu0 0.0
    %249 = vmatpush1.xpose.msra.mxu0 0.0
    %250 = vmatprep.subr.mxu0 0.0
    %251 = vmatpush1.xpose.msra.mxu0 0.0
    %252 = vmatprep.subr.mxu0 0.0
    %253 = vmatpush1.xpose.msra.mxu0 0.0
    %254 = vmatprep.subr.mxu0 0.0
    %v255 = vand.u32 %v70, 4294901760
    %v256 = vsub.f32 %v70, %v255
    %257 = vmatpush1.xpose.msra.mxu0 %v256
    %258 = vmatprep.subr.mxu0 0.0
    %259 = vmatpush2.xpose.msra.mxu0 0.0
    %260 = vmatprep.subr.mxu0 0.0
    %261 = vmatpush2.xpose.msra.mxu0 0.0
    %262 = vmatprep.subr.mxu0 0.0
    %263 = vmatpush2.xpose.msra.mxu0 0.0
    %264 = vmatprep.subr.mxu0 0.0
    %265 = vmatpush2.xpose.msra.mxu0 0.0
    %266 = vmatprep.subr.mxu0 0.0
    %267 = vmatpush2.xpose.msra.mxu0 0.0
    %268 = vmatprep.subr.mxu0 0.0
    %269 = vmatpush2.xpose.msra.mxu0 0.0
    %270 = vmatprep.subr.mxu0 0.0
    %271 = vmatpush2.xpose.msra.mxu0 0.0
    %272 = vmatprep.subr.mxu0 0.0
    %273 = vmatpush2.xpose.msra.mxu0 0.0
    %274 = vmatprep.subr.mxu0 0.0
    %275 = vmatpush2.xpose.msra.mxu0 0.0
    %276 = vmatprep.subr.mxu0 0.0
    %277 = vmatpush2.xpose.msra.mxu0 0.0
    %278 = vmatprep.subr.mxu0 0.0
    %279 = vmatpush2.xpose.msra.mxu0 0.0
    %280 = vmatprep.subr.mxu0 0.0
    %281 = vmatpush2.xpose.msra.mxu0 0.0
    %282 = vmatprep.subr.mxu0 0.0
    %283 = vmatpush2.xpose.msra.mxu0 0.0
    %284 = vmatprep.subr.mxu0 0.0
    %285 = vmatpush2.xpose.msra.mxu0 0.0
    %286 = vmatprep.subr.mxu0 0.0
    %287 = vmatpush2.xpose.msra.mxu0 0.0
    %288 = vmatprep.subr.mxu0 0.0
    %289 = vmatpush2.xpose.msra.mxu0 0.0
    %290 = vmatprep.mubr.f32.mxu0 0.0
    %v291 = vand.u32 %v67, 4294901760
    %v292 = vsub.f32 %v67, %v291
    %293 = vmatmul.mubr.f32.gmra.mxu0 %v292
    %v294 = vpop.f32.mrf.mxu0
    %v295 = vadd.f32 %v221, %v294
    %v296 = vpop.f32.mrf.mxu0
    %297 = vdwg.mxu0
    %298 = vmatprep.subr.mxu0 0.0
    %299 = vmatpush1.xpose.msra.mxu0 0.0
    %300 = vmatprep.subr.mxu0 0.0
    %301 = vmatpush1.xpose.msra.mxu0 0.0
    %302 = vmatprep.subr.mxu0 0.0
    %303 = vmatpush1.xpose.msra.mxu0 0.0
    %304 = vmatprep.subr.mxu0 0.0
    %305 = vmatpush1.xpose.msra.mxu0 0.0
    %306 = vmatprep.subr.mxu0 0.0
    %307 = vmatpush1.xpose.msra.mxu0 0.0
    %308 = vmatprep.subr.mxu0 0.0
    %309 = vmatpush1.xpose.msra.mxu0 0.0
    %310 = vmatprep.subr.mxu0 0.0
    %311 = vmatpush1.xpose.msra.mxu0 0.0
    %312 = vmatprep.subr.mxu0 0.0
    %313 = vmatpush1.xpose.msra.mxu0 0.0
    %314 = vmatprep.subr.mxu0 0.0
    %315 = vmatpush1.xpose.msra.mxu0 0.0
    %316 = vmatprep.subr.mxu0 0.0
    %317 = vmatpush1.xpose.msra.mxu0 0.0
    %318 = vmatprep.subr.mxu0 0.0
    %319 = vmatpush1.xpose.msra.mxu0 0.0
    %320 = vmatprep.subr.mxu0 0.0
    %321 = vmatpush1.xpose.msra.mxu0 0.0
    %322 = vmatprep.subr.mxu0 0.0
    %323 = vmatpush1.xpose.msra.mxu0 0.0
    %324 = vmatprep.subr.mxu0 0.0
    %325 = vmatpush1.xpose.msra.mxu0 0.0
    %326 = vmatprep.subr.mxu0 0.0
    %327 = vmatpush1.xpose.msra.mxu0 0.0
    %328 = vmatprep.subr.mxu0 0.0
    %v329 = vand.u32 %v70, 4294901760
    %330 = vmatpush1.xpose.msra.mxu0 %v329
    %331 = vmatprep.subr.mxu0 0.0
    %332 = vmatpush2.xpose.msra.mxu0 0.0
    %333 = vmatprep.subr.mxu0 0.0
    %334 = vmatpush2.xpose.msra.mxu0 0.0
    %335 = vmatprep.subr.mxu0 0.0
    %336 = vmatpush2.xpose.msra.mxu0 0.0
    %337 = vmatprep.subr.mxu0 0.0
    %338 = vmatpush2.xpose.msra.mxu0 0.0
    %339 = vmatprep.subr.mxu0 0.0
    %340 = vmatpush2.xpose.msra.mxu0 0.0
    %341 = vmatprep.subr.mxu0 0.0
    %342 = vmatpush2.xpose.msra.mxu0 0.0
    %343 = vmatprep.subr.mxu0 0.0
    %344 = vmatpush2.xpose.msra.mxu0 0.0
    %345 = vmatprep.subr.mxu0 0.0
    %346 = vmatpush2.xpose.msra.mxu0 0.0
    %347 = vmatprep.subr.mxu0 0.0
    %348 = vmatpush2.xpose.msra.mxu0 0.0
    %349 = vmatprep.subr.mxu0 0.0
    %350 = vmatpush2.xpose.msra.mxu0 0.0
    %351 = vmatprep.subr.mxu0 0.0
    %352 = vmatpush2.xpose.msra.mxu0 0.0
    %353 = vmatprep.subr.mxu0 0.0
    %354 = vmatpush2.xpose.msra.mxu0 0.0
    %355 = vmatprep.subr.mxu0 0.0
    %356 = vmatpush2.xpose.msra.mxu0 0.0
    %357 = vmatprep.subr.mxu0 0.0
    %358 = vmatpush2.xpose.msra.mxu0 0.0
    %359 = vmatprep.subr.mxu0 0.0
    %360 = vmatpush2.xpose.msra.mxu0 0.0
    %361 = vmatprep.subr.mxu0 0.0
    %362 = vmatpush2.xpose.msra.mxu0 0.0
    %363 = vmatprep.mubr.f32.mxu0 0.0
    %v364 = vand.u32 %v67, 4294901760
    %v365 = vsub.f32 %v67, %v364
    %v366 = vand.u32 %v365, 4294901760
    %367 = vmatmul.mubr.f32.gmra.mxu0 %v366
    %v368 = vpop.f32.mrf.mxu0
    %v369 = vadd.f32 %v295, %v368
    %v370 = vpop.f32.mrf.mxu0
    %371 = vdwg.mxu0
    %372 = vmatprep.subr.mxu0 0.0
    %373 = vmatpush1.xpose.msra.mxu0 0.0
    %374 = vmatprep.subr.mxu0 0.0
    %375 = vmatpush1.xpose.msra.mxu0 0.0
    %376 = vmatprep.subr.mxu0 0.0
    %377 = vmatpush1.xpose.msra.mxu0 0.0
    %378 = vmatprep.subr.mxu0 0.0
    %379 = vmatpush1.xpose.msra.mxu0 0.0
    %380 = vmatprep.subr.mxu0 0.0
    %381 = vmatpush1.xpose.msra.mxu0 0.0
    %382 = vmatprep.subr.mxu0 0.0
    %383 = vmatpush1.xpose.msra.mxu0 0.0
    %384 = vmatprep.subr.mxu0 0.0
    %385 = vmatpush1.xpose.msra.mxu0 0.0
    %386 = vmatprep.subr.mxu0 0.0
    %387 = vmatpush1.xpose.msra.mxu0 0.0
    %388 = vmatprep.subr.mxu0 0.0
    %389 = vmatpush1.xpose.msra.mxu0 0.0
    %390 = vmatprep.subr.mxu0 0.0
    %391 = vmatpush1.xpose.msra.mxu0 0.0
    %392 = vmatprep.subr.mxu0 0.0
    %393 = vmatpush1.xpose.msra.mxu0 0.0
    %394 = vmatprep.subr.mxu0 0.0
    %395 = vmatpush1.xpose.msra.mxu0 0.0
    %396 = vmatprep.subr.mxu0 0.0
    %397 = vmatpush1.xpose.msra.mxu0 0.0
    %398 = vmatprep.subr.mxu0 0.0
    %399 = vmatpush1.xpose.msra.mxu0 0.0
    %400 = vmatprep.subr.mxu0 0.0
    %401 = vmatpush1.xpose.msra.mxu0 0.0
    %402 = vmatprep.subr.mxu0 0.0
    %v403 = vand.u32 %v70, 4294901760
    %v404 = vsub.f32 %v70, %v403
    %v405 = vand.u32 %v404, 4294901760
    %406 = vmatpush1.xpose.msra.mxu0 %v405
    %407 = vmatprep.subr.mxu0 0.0
    %408 = vmatpush2.xpose.msra.mxu0 0.0
    %409 = vmatprep.subr.mxu0 0.0
    %410 = vmatpush2.xpose.msra.mxu0 0.0
    %411 = vmatprep.subr.mxu0 0.0
    %412 = vmatpush2.xpose.msra.mxu0 0.0
    %413 = vmatprep.subr.mxu0 0.0
    %414 = vmatpush2.xpose.msra.mxu0 0.0
    %415 = vmatprep.subr.mxu0 0.0
    %416 = vmatpush2.xpose.msra.mxu0 0.0
    %417 = vmatprep.subr.mxu0 0.0
    %418 = vmatpush2.xpose.msra.mxu0 0.0
    %419 = vmatprep.subr.mxu0 0.0
    %420 = vmatpush2.xpose.msra.mxu0 0.0
    %421 = vmatprep.subr.mxu0 0.0
    %422 = vmatpush2.xpose.msra.mxu0 0.0
    %423 = vmatprep.subr.mxu0 0.0
    %424 = vmatpush2.xpose.msra.mxu0 0.0
    %425 = vmatprep.subr.mxu0 0.0
    %426 = vmatpush2.xpose.msra.mxu0 0.0
    %427 = vmatprep.subr.mxu0 0.0
    %428 = vmatpush2.xpose.msra.mxu0 0.0
    %429 = vmatprep.subr.mxu0 0.0
    %430 = vmatpush2.xpose.msra.mxu0 0.0
    %431 = vmatprep.subr.mxu0 0.0
    %432 = vmatpush2.xpose.msra.mxu0 0.0
    %433 = vmatprep.subr.mxu0 0.0
    %434 = vmatpush2.xpose.msra.mxu0 0.0
    %435 = vmatprep.subr.mxu0 0.0
    %436 = vmatpush2.xpose.msra.mxu0 0.0
    %437 = vmatprep.subr.mxu0 0.0
    %438 = vmatpush2.xpose.msra.mxu0 0.0
    %439 = vmatprep.mubr.f32.mxu0 0.0
    %v440 = vand.u32 %v67, 4294901760
    %441 = vmatmul.mubr.f32.gmra.mxu0 %v440
    %v442 = vpop.f32.mrf.mxu0
    %v443 = vadd.f32 %v369, %v442
    %v444 = vpop.f32.mrf.mxu0
    %445 = vdwg.mxu0
    %446 = vmatprep.subr.mxu0 0.0
    %447 = vmatpush1.xpose.msra.mxu0 0.0
    %448 = vmatprep.subr.mxu0 0.0
    %449 = vmatpush1.xpose.msra.mxu0 0.0
    %450 = vmatprep.subr.mxu0 0.0
    %451 = vmatpush1.xpose.msra.mxu0 0.0
    %452 = vmatprep.subr.mxu0 0.0
    %453 = vmatpush1.xpose.msra.mxu0 0.0
    %454 = vmatprep.subr.mxu0 0.0
    %455 = vmatpush1.xpose.msra.mxu0 0.0
    %456 = vmatprep.subr.mxu0 0.0
    %457 = vmatpush1.xpose.msra.mxu0 0.0
    %458 = vmatprep.subr.mxu0 0.0
    %459 = vmatpush1.xpose.msra.mxu0 0.0
    %460 = vmatprep.subr.mxu0 0.0
    %461 = vmatpush1.xpose.msra.mxu0 0.0
    %462 = vmatprep.subr.mxu0 0.0
    %463 = vmatpush1.xpose.msra.mxu0 0.0
    %464 = vmatprep.subr.mxu0 0.0
    %465 = vmatpush1.xpose.msra.mxu0 0.0
    %466 = vmatprep.subr.mxu0 0.0
    %467 = vmatpush1.xpose.msra.mxu0 0.0
    %468 = vmatprep.subr.mxu0 0.0
    %469 = vmatpush1.xpose.msra.mxu0 0.0
    %470 = vmatprep.subr.mxu0 0.0
    %471 = vmatpush1.xpose.msra.mxu0 0.0
    %472 = vmatprep.subr.mxu0 0.0
    %473 = vmatpush1.xpose.msra.mxu0 0.0
    %474 = vmatprep.subr.mxu0 0.0
    %475 = vmatpush1.xpose.msra.mxu0 0.0
    %476 = vmatprep.subr.mxu0 0.0
    %v477 = vand.u32 %v70, 4294901760
    %478 = vmatpush1.xpose.msra.mxu0 %v477
    %479 = vmatprep.subr.mxu0 0.0
    %480 = vmatpush2.xpose.msra.mxu0 0.0
    %481 = vmatprep.subr.mxu0 0.0
    %482 = vmatpush2.xpose.msra.mxu0 0.0
    %483 = vmatprep.subr.mxu0 0.0
    %484 = vmatpush2.xpose.msra.mxu0 0.0
    %485 = vmatprep.subr.mxu0 0.0
    %486 = vmatpush2.xpose.msra.mxu0 0.0
    %487 = vmatprep.subr.mxu0 0.0
    %488 = vmatpush2.xpose.msra.mxu0 0.0
    %489 = vmatprep.subr.mxu0 0.0
    %490 = vmatpush2.xpose.msra.mxu0 0.0
    %491 = vmatprep.subr.mxu0 0.0
    %492 = vmatpush2.xpose.msra.mxu0 0.0
    %493 = vmatprep.subr.mxu0 0.0
    %494 = vmatpush2.xpose.msra.mxu0 0.0
    %495 = vmatprep.subr.mxu0 0.0
    %496 = vmatpush2.xpose.msra.mxu0 0.0
    %497 = vmatprep.subr.mxu0 0.0
    %498 = vmatpush2.xpose.msra.mxu0 0.0
    %499 = vmatprep.subr.mxu0 0.0
    %500 = vmatpush2.xpose.msra.mxu0 0.0
    %501 = vmatprep.subr.mxu0 0.0
    %502 = vmatpush2.xpose.msra.mxu0 0.0
    %503 = vmatprep.subr.mxu0 0.0
    %504 = vmatpush2.xpose.msra.mxu0 0.0
    %505 = vmatprep.subr.mxu0 0.0
    %506 = vmatpush2.xpose.msra.mxu0 0.0
    %507 = vmatprep.subr.mxu0 0.0
    %508 = vmatpush2.xpose.msra.mxu0 0.0
    %509 = vmatprep.subr.mxu0 0.0
    %510 = vmatpush2.xpose.msra.mxu0 0.0
    %511 = vmatprep.mubr.f32.mxu0 0.0
    %v512 = vand.u32 %v67, 4294901760
    %513 = vmatmul.mubr.f32.gmra.mxu0 %v512
    %v514 = vpop.f32.mrf.mxu0
    %v515 = vadd.f32 %v443, %v514
    %v516 = vpop.f32.mrf.mxu0
    %517 = vdwg.mxu0
    %518 = vst.msk [vmem:[#allocation4] sm:$0xff] %vm65, %v515
    %v519 = vld [vmem:[#allocation6] sm:$0x1]
    %v520 = vld [vmem:[%s1] sm:$0x1]
    %v521 = vld [vmem:[%s2] sm:$0x1]
    %v522 = vld [vmem:[#allocation2] sm:$0x1]
    %v523 = vld [vmem:[#allocation3] sm:$0x1]
    %v524 = vld [vmem:[#allocation4] sm:$0x1]
    %v525 = vmul.f32 %v520, %v522
    %v526 = vsub.f32 %v521, %v525
    %v527 = vmul.f32 %v519, %v523
    %v528 = vsub.f32 %v526, %v527
    %v529 = vadd.f32 %v528, %v524
    %v530 = vmul.f32 %v529, 0.01
    %v531 = vadd.f32 %v523, %v530
    %v532 = vmul.f32 %v531, 0.01
    %v533 = vadd.f32 %v522, %v532
    %vm534 = vcmask 57344
    %535 = vst.msk [vmem:[#allocation5] sm:$0x1] %vm534, %v533
    %v536 = vld [vmem:[#allocation4 + $0x1] sm:$0x1]
    %v537 = vmul.f32 %v520, %v533
    %v538 = vsub.f32 %v521, %v537
    %v539 = vmul.f32 %v519, %v531
    %v540 = vsub.f32 %v538, %v539
    %v541 = vadd.f32 %v540, %v536
    %v542 = vmul.f32 %v541, 0.01
    %v543 = vadd.f32 %v531, %v542
    %v544 = vmul.f32 %v543, 0.01
    %v545 = vadd.f32 %v533, %v544
    %546 = vst.msk [vmem:[#allocation5 + $0x1] sm:$0x1] %vm534, %v545
    %v547 = vld [vmem:[#allocation4 + $0x2] sm:$0x1]
    %v548 = vmul.f32 %v520, %v545
    %v549 = vsub.f32 %v521, %v548
    %v550 = vmul.f32 %v519, %v543
    %v551 = vsub.f32 %v549, %v550
    %v552 = vadd.f32 %v551, %v547
    %v553 = vmul.f32 %v552, 0.01
    %v554 = vadd.f32 %v543, %v553
    %v555 = vmul.f32 %v554, 0.01
    %v556 = vadd.f32 %v545, %v555
    %557 = vst.msk [vmem:[#allocation5 + $0x2] sm:$0x1] %vm534, %v556
    %v558 = vld [vmem:[#allocation4 + $0x3] sm:$0x1]
    %v559 = vmul.f32 %v520, %v556
    %v560 = vsub.f32 %v521, %v559
    %v561 = vmul.f32 %v519, %v554
    %v562 = vsub.f32 %v560, %v561
    %v563 = vadd.f32 %v562, %v558
    %v564 = vmul.f32 %v563, 0.01
    %v565 = vadd.f32 %v554, %v564
    %v566 = vmul.f32 %v565, 0.01
    %v567 = vadd.f32 %v556, %v566
    %568 = vst.msk [vmem:[#allocation5 + $0x3] sm:$0x1] %vm534, %v567
    %v569 = vld [vmem:[#allocation4 + $0x4] sm:$0x1]
    %v570 = vmul.f32 %v520, %v567
    %v571 = vsub.f32 %v521, %v570
    %v572 = vmul.f32 %v519, %v565
    %v573 = vsub.f32 %v571, %v572
    %v574 = vadd.f32 %v573, %v569
    %v575 = vmul.f32 %v574, 0.01
    %v576 = vadd.f32 %v565, %v575
    %v577 = vmul.f32 %v576, 0.01
    %v578 = vadd.f32 %v567, %v577
    %579 = vst.msk [vmem:[#allocation5 + $0x4] sm:$0x1] %vm534, %v578
    %v580 = vld [vmem:[#allocation4 + $0x5] sm:$0x1]
    %v581 = vmul.f32 %v520, %v578
    %v582 = vsub.f32 %v521, %v581
    %v583 = vmul.f32 %v519, %v576
    %v584 = vsub.f32 %v582, %v583
    %v585 = vadd.f32 %v584, %v580
    %v586 = vmul.f32 %v585, 0.01
    %v587 = vadd.f32 %v576, %v586
    %v588 = vmul.f32 %v587, 0.01
    %v589 = vadd.f32 %v578, %v588
    %590 = vst.msk [vmem:[#allocation5 + $0x5] sm:$0x1] %vm534, %v589
    %v591 = vld [vmem:[#allocation4 + $0x6] sm:$0x1]
    %v592 = vmul.f32 %v520, %v589
    %v593 = vsub.f32 %v521, %v592
    %v594 = vmul.f32 %v519, %v587
    %v595 = vsub.f32 %v593, %v594
    %v596 = vadd.f32 %v595, %v591
    %v597 = vmul.f32 %v596, 0.01
    %v598 = vadd.f32 %v587, %v597
    %v599 = vmul.f32 %v598, 0.01
    %v600 = vadd.f32 %v589, %v599
    %601 = vst.msk [vmem:[#allocation5 + $0x6] sm:$0x1] %vm534, %v600
    %v602 = vld [vmem:[#allocation4 + $0x7] sm:$0x1]
    %v603 = vmul.f32 %v520, %v600
    %v604 = vsub.f32 %v521, %v603
    %v605 = vmul.f32 %v519, %v598
    %v606 = vsub.f32 %v604, %v605
    %v607 = vadd.f32 %v606, %v602
    %v608 = vmul.f32 %v607, 0.01
    %v609 = vadd.f32 %v598, %v608
    %v610 = vmul.f32 %v609, 0.01
    %v611 = vadd.f32 %v600, %v610
    %612 = vst.msk [vmem:[#allocation5 + $0x7] sm:$0x1] %vm534, %v611
    %613 = vst.msk [vmem:[#allocation2] sm:$0x1] %vm534, %v611
    %614 = vst.msk [vmem:[#allocation3] sm:$0x1] %vm534, %v609
    %s615 = smul.u32 0, 8
    %s616 = ssub.s32 8, %s615
    %v617 = vstv %s616
    %vm618 = vcmp.lt.s32.totalorder %v56, %v617
    %v619 = vld [vmem:[#allocation5] sm:$0xff]
    %v620 = vsel %vm618, %v619, 0.0
    %v622 = vsel %vm65, %v620, 0
    %624 = vmatprep.subr.mxu0 0.0
    %625 = vmatpush1.xpose.msra.mxu0 0.0
    %626 = vmatprep.subr.mxu0 0.0
    %627 = vmatpush1.xpose.msra.mxu0 0.0
    %628 = vmatprep.subr.mxu0 0.0
    %629 = vmatpush1.xpose.msra.mxu0 0.0
    %630 = vmatprep.subr.mxu0 0.0
    %631 = vmatpush1.xpose.msra.mxu0 0.0
    %632 = vmatprep.subr.mxu0 0.0
    %633 = vmatpush1.xpose.msra.mxu0 0.0
    %634 = vmatprep.subr.mxu0 0.0
    %635 = vmatpush1.xpose.msra.mxu0 0.0
    %636 = vmatprep.subr.mxu0 0.0
    %637 = vmatpush1.xpose.msra.mxu0 0.0
    %638 = vmatprep.subr.mxu0 0.0
    %639 = vmatpush1.xpose.msra.mxu0 0.0
    %640 = vmatprep.subr.mxu0 0.0
    %641 = vmatpush1.xpose.msra.mxu0 0.0
    %642 = vmatprep.subr.mxu0 0.0
    %643 = vmatpush1.xpose.msra.mxu0 0.0
    %644 = vmatprep.subr.mxu0 0.0
    %645 = vmatpush1.xpose.msra.mxu0 0.0
    %646 = vmatprep.subr.mxu0 0.0
    %647 = vmatpush1.xpose.msra.mxu0 0.0
    %648 = vmatprep.subr.mxu0 0.0
    %649 = vmatpush1.xpose.msra.mxu0 0.0
    %650 = vmatprep.subr.mxu0 0.0
    %651 = vmatpush1.xpose.msra.mxu0 0.0
    %652 = vmatprep.subr.mxu0 0.0
    %653 = vmatpush1.xpose.msra.mxu0 0.0
    %654 = vmatprep.subr.mxu0 0.0
    %v655 = vand.u32 %v622, 4294901760
    %656 = vmatpush1.xpose.msra.mxu0 %v655
    %657 = vmatprep.subr.mxu0 0.0
    %658 = vmatpush2.xpose.msra.mxu0 0.0
    %659 = vmatprep.subr.mxu0 0.0
    %660 = vmatpush2.xpose.msra.mxu0 0.0
    %661 = vmatprep.subr.mxu0 0.0
    %662 = vmatpush2.xpose.msra.mxu0 0.0
    %663 = vmatprep.subr.mxu0 0.0
    %664 = vmatpush2.xpose.msra.mxu0 0.0
    %665 = vmatprep.subr.mxu0 0.0
    %666 = vmatpush2.xpose.msra.mxu0 0.0
    %667 = vmatprep.subr.mxu0 0.0
    %668 = vmatpush2.xpose.msra.mxu0 0.0
    %669 = vmatprep.subr.mxu0 0.0
    %670 = vmatpush2.xpose.msra.mxu0 0.0
    %671 = vmatprep.subr.mxu0 0.0
    %672 = vmatpush2.xpose.msra.mxu0 0.0
    %673 = vmatprep.subr.mxu0 0.0
    %674 = vmatpush2.xpose.msra.mxu0 0.0
    %675 = vmatprep.subr.mxu0 0.0
    %676 = vmatpush2.xpose.msra.mxu0 0.0
    %677 = vmatprep.subr.mxu0 0.0
    %678 = vmatpush2.xpose.msra.mxu0 0.0
    %679 = vmatprep.subr.mxu0 0.0
    %680 = vmatpush2.xpose.msra.mxu0 0.0
    %681 = vmatprep.subr.mxu0 0.0
    %682 = vmatpush2.xpose.msra.mxu0 0.0
    %683 = vmatprep.subr.mxu0 0.0
    %684 = vmatpush2.xpose.msra.mxu0 0.0
    %685 = vmatprep.subr.mxu0 0.0
    %686 = vmatpush2.xpose.msra.mxu0 0.0
    %687 = vmatprep.subr.mxu0 0.0
    %688 = vmatpush2.xpose.msra.mxu0 0.0
    %689 = vmatprep.mubr.f32.mxu0 0.0
    %v690 = vand.u32 %v67, 4294901760
    %v691 = vsub.f32 %v67, %v690
    %v692 = vand.u32 %v691, 4294901760
    %v693 = vsub.f32 %v691, %v692
    %v694 = vand.u32 %v693, 4294901760
    %695 = vmatmul.mubr.f32.gmra.mxu0 %v694
    %v696 = vpop.f32.mrf.mxu0
    %v697 = vadd.f32 0.0, %v696
    %v698 = vpop.f32.mrf.mxu0
    %699 = vdwg.mxu0
    %700 = vmatprep.subr.mxu0 0.0
    %701 = vmatpush1.xpose.msra.mxu0 0.0
    %702 = vmatprep.subr.mxu0 0.0
    %703 = vmatpush1.xpose.msra.mxu0 0.0
    %704 = vmatprep.subr.mxu0 0.0
    %705 = vmatpush1.xpose.msra.mxu0 0.0
    %706 = vmatprep.subr.mxu0 0.0
    %707 = vmatpush1.xpose.msra.mxu0 0.0
    %708 = vmatprep.subr.mxu0 0.0
    %709 = vmatpush1.xpose.msra.mxu0 0.0
    %710 = vmatprep.subr.mxu0 0.0
    %711 = vmatpush1.xpose.msra.mxu0 0.0
    %712 = vmatprep.subr.mxu0 0.0
    %713 = vmatpush1.xpose.msra.mxu0 0.0
    %714 = vmatprep.subr.mxu0 0.0
    %715 = vmatpush1.xpose.msra.mxu0 0.0
    %716 = vmatprep.subr.mxu0 0.0
    %717 = vmatpush1.xpose.msra.mxu0 0.0
    %718 = vmatprep.subr.mxu0 0.0
    %719 = vmatpush1.xpose.msra.mxu0 0.0
    %720 = vmatprep.subr.mxu0 0.0
    %721 = vmatpush1.xpose.msra.mxu0 0.0
    %722 = vmatprep.subr.mxu0 0.0
    %723 = vmatpush1.xpose.msra.mxu0 0.0
    %724 = vmatprep.subr.mxu0 0.0
    %725 = vmatpush1.xpose.msra.mxu0 0.0
    %726 = vmatprep.subr.mxu0 0.0
    %727 = vmatpush1.xpose.msra.mxu0 0.0
    %728 = vmatprep.subr.mxu0 0.0
    %729 = vmatpush1.xpose.msra.mxu0 0.0
    %730 = vmatprep.subr.mxu0 0.0
    %v731 = vand.u32 %v622, 4294901760
    %v732 = vsub.f32 %v622, %v731
    %v733 = vand.u32 %v732, 4294901760
    %v734 = vsub.f32 %v732, %v733
    %v735 = vand.u32 %v734, 4294901760
    %736 = vmatpush1.xpose.msra.mxu0 %v735
    %737 = vmatprep.subr.mxu0 0.0
    %738 = vmatpush2.xpose.msra.mxu0 0.0
    %739 = vmatprep.subr.mxu0 0.0
    %740 = vmatpush2.xpose.msra.mxu0 0.0
    %741 = vmatprep.subr.mxu0 0.0
    %742 = vmatpush2.xpose.msra.mxu0 0.0
    %743 = vmatprep.subr.mxu0 0.0
    %744 = vmatpush2.xpose.msra.mxu0 0.0
    %745 = vmatprep.subr.mxu0 0.0
    %746 = vmatpush2.xpose.msra.mxu0 0.0
    %747 = vmatprep.subr.mxu0 0.0
    %748 = vmatpush2.xpose.msra.mxu0 0.0
    %749 = vmatprep.subr.mxu0 0.0
    %750 = vmatpush2.xpose.msra.mxu0 0.0
    %751 = vmatprep.subr.mxu0 0.0
    %752 = vmatpush2.xpose.msra.mxu0 0.0
    %753 = vmatprep.subr.mxu0 0.0
    %754 = vmatpush2.xpose.msra.mxu0 0.0
    %755 = vmatprep.subr.mxu0 0.0
    %756 = vmatpush2.xpose.msra.mxu0 0.0
    %757 = vmatprep.subr.mxu0 0.0
    %758 = vmatpush2.xpose.msra.mxu0 0.0
    %759 = vmatprep.subr.mxu0 0.0
    %760 = vmatpush2.xpose.msra.mxu0 0.0
    %761 = vmatprep.subr.mxu0 0.0
    %762 = vmatpush2.xpose.msra.mxu0 0.0
    %763 = vmatprep.subr.mxu0 0.0
    %764 = vmatpush2.xpose.msra.mxu0 0.0
    %765 = vmatprep.subr.mxu0 0.0
    %766 = vmatpush2.xpose.msra.mxu0 0.0
    %767 = vmatprep.subr.mxu0 0.0
    %768 = vmatpush2.xpose.msra.mxu0 0.0
    %769 = vmatprep.mubr.f32.mxu0 0.0
    %v770 = vand.u32 %v67, 4294901760
    %771 = vmatmul.mubr.f32.gmra.mxu0 %v770
    %v772 = vpop.f32.mrf.mxu0
    %v773 = vadd.f32 %v697, %v772
    %v774 = vpop.f32.mrf.mxu0
    %775 = vdwg.mxu0
    %776 = vmatprep.subr.mxu0 0.0
    %777 = vmatpush1.xpose.msra.mxu0 0.0
    %778 = vmatprep.subr.mxu0 0.0
    %779 = vmatpush1.xpose.msra.mxu0 0.0
    %780 = vmatprep.subr.mxu0 0.0
    %781 = vmatpush1.xpose.msra.mxu0 0.0
    %782 = vmatprep.subr.mxu0 0.0
    %783 = vmatpush1.xpose.msra.mxu0 0.0
    %784 = vmatprep.subr.mxu0 0.0
    %785 = vmatpush1.xpose.msra.mxu0 0.0
    %786 = vmatprep.subr.mxu0 0.0
    %787 = vmatpush1.xpose.msra.mxu0 0.0
    %788 = vmatprep.subr.mxu0 0.0
    %789 = vmatpush1.xpose.msra.mxu0 0.0
    %790 = vmatprep.subr.mxu0 0.0
    %791 = vmatpush1.xpose.msra.mxu0 0.0
    %792 = vmatprep.subr.mxu0 0.0
    %793 = vmatpush1.xpose.msra.mxu0 0.0
    %794 = vmatprep.subr.mxu0 0.0
    %795 = vmatpush1.xpose.msra.mxu0 0.0
    %796 = vmatprep.subr.mxu0 0.0
    %797 = vmatpush1.xpose.msra.mxu0 0.0
    %798 = vmatprep.subr.mxu0 0.0
    %799 = vmatpush1.xpose.msra.mxu0 0.0
    %800 = vmatprep.subr.mxu0 0.0
    %801 = vmatpush1.xpose.msra.mxu0 0.0
    %802 = vmatprep.subr.mxu0 0.0
    %803 = vmatpush1.xpose.msra.mxu0 0.0
    %804 = vmatprep.subr.mxu0 0.0
    %805 = vmatpush1.xpose.msra.mxu0 0.0
    %806 = vmatprep.subr.mxu0 0.0
    %v807 = vand.u32 %v622, 4294901760
    %v808 = vsub.f32 %v622, %v807
    %809 = vmatpush1.xpose.msra.mxu0 %v808
    %810 = vmatprep.subr.mxu0 0.0
    %811 = vmatpush2.xpose.msra.mxu0 0.0
    %812 = vmatprep.subr.mxu0 0.0
    %813 = vmatpush2.xpose.msra.mxu0 0.0
    %814 = vmatprep.subr.mxu0 0.0
    %815 = vmatpush2.xpose.msra.mxu0 0.0
    %816 = vmatprep.subr.mxu0 0.0
    %817 = vmatpush2.xpose.msra.mxu0 0.0
    %818 = vmatprep.subr.mxu0 0.0
    %819 = vmatpush2.xpose.msra.mxu0 0.0
    %820 = vmatprep.subr.mxu0 0.0
    %821 = vmatpush2.xpose.msra.mxu0 0.0
    %822 = vmatprep.subr.mxu0 0.0
    %823 = vmatpush2.xpose.msra.mxu0 0.0
    %824 = vmatprep.subr.mxu0 0.0
    %825 = vmatpush2.xpose.msra.mxu0 0.0
    %826 = vmatprep.subr.mxu0 0.0
    %827 = vmatpush2.xpose.msra.mxu0 0.0
    %828 = vmatprep.subr.mxu0 0.0
    %829 = vmatpush2.xpose.msra.mxu0 0.0
    %830 = vmatprep.subr.mxu0 0.0
    %831 = vmatpush2.xpose.msra.mxu0 0.0
    %832 = vmatprep.subr.mxu0 0.0
    %833 = vmatpush2.xpose.msra.mxu0 0.0
    %834 = vmatprep.subr.mxu0 0.0
    %835 = vmatpush2.xpose.msra.mxu0 0.0
    %836 = vmatprep.subr.mxu0 0.0
    %837 = vmatpush2.xpose.msra.mxu0 0.0
    %838 = vmatprep.subr.mxu0 0.0
    %839 = vmatpush2.xpose.msra.mxu0 0.0
    %840 = vmatprep.subr.mxu0 0.0
    %841 = vmatpush2.xpose.msra.mxu0 0.0
    %842 = vmatprep.mubr.f32.mxu0 0.0
    %v843 = vand.u32 %v67, 4294901760
    %v844 = vsub.f32 %v67, %v843
    %845 = vmatmul.mubr.f32.gmra.mxu0 %v844
    %v846 = vpop.f32.mrf.mxu0
    %v847 = vadd.f32 %v773, %v846
    %v848 = vpop.f32.mrf.mxu0
    %849 = vdwg.mxu0
    %850 = vmatprep.subr.mxu0 0.0
    %851 = vmatpush1.xpose.msra.mxu0 0.0
    %852 = vmatprep.subr.mxu0 0.0
    %853 = vmatpush1.xpose.msra.mxu0 0.0
    %854 = vmatprep.subr.mxu0 0.0
    %855 = vmatpush1.xpose.msra.mxu0 0.0
    %856 = vmatprep.subr.mxu0 0.0
    %857 = vmatpush1.xpose.msra.mxu0 0.0
    %858 = vmatprep.subr.mxu0 0.0
    %859 = vmatpush1.xpose.msra.mxu0 0.0
    %860 = vmatprep.subr.mxu0 0.0
    %861 = vmatpush1.xpose.msra.mxu0 0.0
    %862 = vmatprep.subr.mxu0 0.0
    %863 = vmatpush1.xpose.msra.mxu0 0.0
    %864 = vmatprep.subr.mxu0 0.0
    %865 = vmatpush1.xpose.msra.mxu0 0.0
    %866 = vmatprep.subr.mxu0 0.0
    %867 = vmatpush1.xpose.msra.mxu0 0.0
    %868 = vmatprep.subr.mxu0 0.0
    %869 = vmatpush1.xpose.msra.mxu0 0.0
    %870 = vmatprep.subr.mxu0 0.0
    %871 = vmatpush1.xpose.msra.mxu0 0.0
    %872 = vmatprep.subr.mxu0 0.0
    %873 = vmatpush1.xpose.msra.mxu0 0.0
    %874 = vmatprep.subr.mxu0 0.0
    %875 = vmatpush1.xpose.msra.mxu0 0.0
    %876 = vmatprep.subr.mxu0 0.0
    %877 = vmatpush1.xpose.msra.mxu0 0.0
    %878 = vmatprep.subr.mxu0 0.0
    %879 = vmatpush1.xpose.msra.mxu0 0.0
    %880 = vmatprep.subr.mxu0 0.0
    %v881 = vand.u32 %v622, 4294901760
    %882 = vmatpush1.xpose.msra.mxu0 %v881
    %883 = vmatprep.subr.mxu0 0.0
    %884 = vmatpush2.xpose.msra.mxu0 0.0
    %885 = vmatprep.subr.mxu0 0.0
    %886 = vmatpush2.xpose.msra.mxu0 0.0
    %887 = vmatprep.subr.mxu0 0.0
    %888 = vmatpush2.xpose.msra.mxu0 0.0
    %889 = vmatprep.subr.mxu0 0.0
    %890 = vmatpush2.xpose.msra.mxu0 0.0
    %891 = vmatprep.subr.mxu0 0.0
    %892 = vmatpush2.xpose.msra.mxu0 0.0
    %893 = vmatprep.subr.mxu0 0.0
    %894 = vmatpush2.xpose.msra.mxu0 0.0
    %895 = vmatprep.subr.mxu0 0.0
    %896 = vmatpush2.xpose.msra.mxu0 0.0
    %897 = vmatprep.subr.mxu0 0.0
    %898 = vmatpush2.xpose.msra.mxu0 0.0
    %899 = vmatprep.subr.mxu0 0.0
    %900 = vmatpush2.xpose.msra.mxu0 0.0
    %901 = vmatprep.subr.mxu0 0.0
    %902 = vmatpush2.xpose.msra.mxu0 0.0
    %903 = vmatprep.subr.mxu0 0.0
    %904 = vmatpush2.xpose.msra.mxu0 0.0
    %905 = vmatprep.subr.mxu0 0.0
    %906 = vmatpush2.xpose.msra.mxu0 0.0
    %907 = vmatprep.subr.mxu0 0.0
    %908 = vmatpush2.xpose.msra.mxu0 0.0
    %909 = vmatprep.subr.mxu0 0.0
    %910 = vmatpush2.xpose.msra.mxu0 0.0
    %911 = vmatprep.subr.mxu0 0.0
    %912 = vmatpush2.xpose.msra.mxu0 0.0
    %913 = vmatprep.subr.mxu0 0.0
    %914 = vmatpush2.xpose.msra.mxu0 0.0
    %915 = vmatprep.mubr.f32.mxu0 0.0
    %v916 = vand.u32 %v67, 4294901760
    %v917 = vsub.f32 %v67, %v916
    %v918 = vand.u32 %v917, 4294901760
    %919 = vmatmul.mubr.f32.gmra.mxu0 %v918
    %v920 = vpop.f32.mrf.mxu0
    %v921 = vadd.f32 %v847, %v920
    %v922 = vpop.f32.mrf.mxu0
    %923 = vdwg.mxu0
    %924 = vmatprep.subr.mxu0 0.0
    %925 = vmatpush1.xpose.msra.mxu0 0.0
    %926 = vmatprep.subr.mxu0 0.0
    %927 = vmatpush1.xpose.msra.mxu0 0.0
    %928 = vmatprep.subr.mxu0 0.0
    %929 = vmatpush1.xpose.msra.mxu0 0.0
    %930 = vmatprep.subr.mxu0 0.0
    %931 = vmatpush1.xpose.msra.mxu0 0.0
    %932 = vmatprep.subr.mxu0 0.0
    %933 = vmatpush1.xpose.msra.mxu0 0.0
    %934 = vmatprep.subr.mxu0 0.0
    %935 = vmatpush1.xpose.msra.mxu0 0.0
    %936 = vmatprep.subr.mxu0 0.0
    %937 = vmatpush1.xpose.msra.mxu0 0.0
    %938 = vmatprep.subr.mxu0 0.0
    %939 = vmatpush1.xpose.msra.mxu0 0.0
    %940 = vmatprep.subr.mxu0 0.0
    %941 = vmatpush1.xpose.msra.mxu0 0.0
    %942 = vmatprep.subr.mxu0 0.0
    %943 = vmatpush1.xpose.msra.mxu0 0.0
    %944 = vmatprep.subr.mxu0 0.0
    %945 = vmatpush1.xpose.msra.mxu0 0.0
    %946 = vmatprep.subr.mxu0 0.0
    %947 = vmatpush1.xpose.msra.mxu0 0.0
    %948 = vmatprep.subr.mxu0 0.0
    %949 = vmatpush1.xpose.msra.mxu0 0.0
    %950 = vmatprep.subr.mxu0 0.0
    %951 = vmatpush1.xpose.msra.mxu0 0.0
    %952 = vmatprep.subr.mxu0 0.0
    %953 = vmatpush1.xpose.msra.mxu0 0.0
    %954 = vmatprep.subr.mxu0 0.0
    %v955 = vand.u32 %v622, 4294901760
    %v956 = vsub.f32 %v622, %v955
    %v957 = vand.u32 %v956, 4294901760
    %958 = vmatpush1.xpose.msra.mxu0 %v957
    %959 = vmatprep.subr.mxu0 0.0
    %960 = vmatpush2.xpose.msra.mxu0 0.0
    %961 = vmatprep.subr.mxu0 0.0
    %962 = vmatpush2.xpose.msra.mxu0 0.0
    %963 = vmatprep.subr.mxu0 0.0
    %964 = vmatpush2.xpose.msra.mxu0 0.0
    %965 = vmatprep.subr.mxu0 0.0
    %966 = vmatpush2.xpose.msra.mxu0 0.0
    %967 = vmatprep.subr.mxu0 0.0
    %968 = vmatpush2.xpose.msra.mxu0 0.0
    %969 = vmatprep.subr.mxu0 0.0
    %970 = vmatpush2.xpose.msra.mxu0 0.0
    %971 = vmatprep.subr.mxu0 0.0
    %972 = vmatpush2.xpose.msra.mxu0 0.0
    %973 = vmatprep.subr.mxu0 0.0
    %974 = vmatpush2.xpose.msra.mxu0 0.0
    %975 = vmatprep.subr.mxu0 0.0
    %976 = vmatpush2.xpose.msra.mxu0 0.0
    %977 = vmatprep.subr.mxu0 0.0
    %978 = vmatpush2.xpose.msra.mxu0 0.0
    %979 = vmatprep.subr.mxu0 0.0
    %980 = vmatpush2.xpose.msra.mxu0 0.0
    %981 = vmatprep.subr.mxu0 0.0
    %982 = vmatpush2.xpose.msra.mxu0 0.0
    %983 = vmatprep.subr.mxu0 0.0
    %984 = vmatpush2.xpose.msra.mxu0 0.0
    %985 = vmatprep.subr.mxu0 0.0
    %986 = vmatpush2.xpose.msra.mxu0 0.0
    %987 = vmatprep.subr.mxu0 0.0
    %988 = vmatpush2.xpose.msra.mxu0 0.0
    %989 = vmatprep.subr.mxu0 0.0
    %990 = vmatpush2.xpose.msra.mxu0 0.0
    %991 = vmatprep.mubr.f32.mxu0 0.0
    %v992 = vand.u32 %v67, 4294901760
    %993 = vmatmul.mubr.f32.gmra.mxu0 %v992
    %v994 = vpop.f32.mrf.mxu0
    %v995 = vadd.f32 %v921, %v994
    %v996 = vpop.f32.mrf.mxu0
    %997 = vdwg.mxu0
    %998 = vmatprep.subr.mxu0 0.0
    %999 = vmatpush1.xpose.msra.mxu0 0.0
    %1000 = vmatprep.subr.mxu0 0.0
    %1001 = vmatpush1.xpose.msra.mxu0 0.0
    %1002 = vmatprep.subr.mxu0 0.0
    %1003 = vmatpush1.xpose.msra.mxu0 0.0
    %1004 = vmatprep.subr.mxu0 0.0
    %1005 = vmatpush1.xpose.msra.mxu0 0.0
    %1006 = vmatprep.subr.mxu0 0.0
    %1007 = vmatpush1.xpose.msra.mxu0 0.0
    %1008 = vmatprep.subr.mxu0 0.0
    %1009 = vmatpush1.xpose.msra.mxu0 0.0
    %1010 = vmatprep.subr.mxu0 0.0
    %1011 = vmatpush1.xpose.msra.mxu0 0.0
    %1012 = vmatprep.subr.mxu0 0.0
    %1013 = vmatpush1.xpose.msra.mxu0 0.0
    %1014 = vmatprep.subr.mxu0 0.0
    %1015 = vmatpush1.xpose.msra.mxu0 0.0
    %1016 = vmatprep.subr.mxu0 0.0
    %1017 = vmatpush1.xpose.msra.mxu0 0.0
    %1018 = vmatprep.subr.mxu0 0.0
    %1019 = vmatpush1.xpose.msra.mxu0 0.0
    %1020 = vmatprep.subr.mxu0 0.0
    %1021 = vmatpush1.xpose.msra.mxu0 0.0
    %1022 = vmatprep.subr.mxu0 0.0
    %1023 = vmatpush1.xpose.msra.mxu0 0.0
    %1024 = vmatprep.subr.mxu0 0.0
    %1025 = vmatpush1.xpose.msra.mxu0 0.0
    %1026 = vmatprep.subr.mxu0 0.0
    %1027 = vmatpush1.xpose.msra.mxu0 0.0
    %1028 = vmatprep.subr.mxu0 0.0
    %v1029 = vand.u32 %v622, 4294901760
    %1030 = vmatpush1.xpose.msra.mxu0 %v1029
    %1031 = vmatprep.subr.mxu0 0.0
    %1032 = vmatpush2.xpose.msra.mxu0 0.0
    %1033 = vmatprep.subr.mxu0 0.0
    %1034 = vmatpush2.xpose.msra.mxu0 0.0
    %1035 = vmatprep.subr.mxu0 0.0
    %1036 = vmatpush2.xpose.msra.mxu0 0.0
    %1037 = vmatprep.subr.mxu0 0.0
    %1038 = vmatpush2.xpose.msra.mxu0 0.0
    %1039 = vmatprep.subr.mxu0 0.0
    %1040 = vmatpush2.xpose.msra.mxu0 0.0
    %1041 = vmatprep.subr.mxu0 0.0
    %1042 = vmatpush2.xpose.msra.mxu0 0.0
    %1043 = vmatprep.subr.mxu0 0.0
    %1044 = vmatpush2.xpose.msra.mxu0 0.0
    %1045 = vmatprep.subr.mxu0 0.0
    %1046 = vmatpush2.xpose.msra.mxu0 0.0
    %1047 = vmatprep.subr.mxu0 0.0
    %1048 = vmatpush2.xpose.msra.mxu0 0.0
    %1049 = vmatprep.subr.mxu0 0.0
    %1050 = vmatpush2.xpose.msra.mxu0 0.0
    %1051 = vmatprep.subr.mxu0 0.0
    %1052 = vmatpush2.xpose.msra.mxu0 0.0
    %1053 = vmatprep.subr.mxu0 0.0
    %1054 = vmatpush2.xpose.msra.mxu0 0.0
    %1055 = vmatprep.subr.mxu0 0.0
    %1056 = vmatpush2.xpose.msra.mxu0 0.0
    %1057 = vmatprep.subr.mxu0 0.0
    %1058 = vmatpush2.xpose.msra.mxu0 0.0
    %1059 = vmatprep.subr.mxu0 0.0
    %1060 = vmatpush2.xpose.msra.mxu0 0.0
    %1061 = vmatprep.subr.mxu0 0.0
    %1062 = vmatpush2.xpose.msra.mxu0 0.0
    %1063 = vmatprep.mubr.f32.mxu0 0.0
    %v1064 = vand.u32 %v67, 4294901760
    %1065 = vmatmul.mubr.f32.gmra.mxu0 %v1064
    %v1066 = vpop.f32.mrf.mxu0
    %v1067 = vadd.f32 %v995, %v1066
    %v1068 = vpop.f32.mrf.mxu0
    %1069 = vdwg.mxu0
    %1070 = vst.msk [vmem:[#allocation11] sm:$0xff] %vm65, %v1067
    // Predicated region
    $region34: #{tpu_custom_call.1} parent=1 // pred_check
      _
    $region35: #{tpu_custom_call.1} parent=1 // pred_check_branch
      %1072 = sbr.rel (0) target = $region37
    $region36: #{tpu_custom_call.1} parent=1 // pred_region
      %s1074 = ssub.s32 128, 128
      %1075 = vsyncadd [#allocation8], %s1074
      %s1077 = sshll.u32 [#allocation11], 4
      %s1078 = int_to_ptr.vmem [resolvable:$true] %s1077
      %1080 = dma.vmem_to_hbm [thread:$0]  %s1078, 128, %s5, [#allocation8]
    $region37: #{tpu_custom_call.1} parent=1 // pred_fallthru
      _
    // Predicated region
    $region38: #{tpu_custom_call.1} parent=1 // pred_check
      _
    $region39: #{tpu_custom_call.1} parent=1 // pred_check_branch
      %1082 = sbr.rel (0) target = $region41
    $region40: #{tpu_custom_call.1} parent=1 // pred_region
      %1083 = dma.done [#allocation8], 128
    $region41: #{tpu_custom_call.1} parent=1 // pred_fallthru
      _
    %1084 = vsyncpa [#allocation7], 1
    %1085 = vsyncpa [#allocation10], 1
    %1086 = vsyncpa [#allocation8], 1

</llo_original>
